<compile_context>
chip_gen: v6e
topology: v6e:2x2x1
jax: 0.10.0
libtpu: 0.0.40
codegen_flags: <defaults>
</compile_context>

<pallas_src>
import functools

import jax
import jax.numpy as jnp
from jax.experimental import pallas as pl
from jax.experimental.pallas import tpu as pltpu


# ----------------------------------------------------------------------------
# Fused kernel: cue RNN + mix RNN + AG modulation + classifier head.
# Channels on sublanes, pixels on lanes; cue pixels in [0,P), mix in [P,2P).
# ----------------------------------------------------------------------------
def _qclevr_fused_kernel(x_ref, wx_ref, wh_ref, b_ref, wg_ref, bg_ref,
                         ag_ref, w1_ref, b1_ref, w2_ref, b2_ref,
                         out_ref,
                         h_both, xu_both, flat_buf,
                         *, batch, ch, hw, pix):
    t = pl.program_id(0)
    num_t = pl.num_programs(0)
    P = pix  # = batch * hw (multiple of 128 -> all lane slices are aligned)

    @pl.when(t == 0)
    def _():
        # flush_hidden=True -> zero initial hidden for both streams.
        h_both[...] = jnp.zeros_like(h_both)
        # Time-invariant input drive Wx @ [x_cue | x_mix] + b, computed once.
        xu_both[...] = (jnp.dot(wx_ref[...], x_ref[...],
                                preferred_element_type=jnp.float32)
                        + b_ref[...])

    # Single fused hidden recurrence for both streams (uses previous hiddens).
    pre = xu_both[...] + jnp.dot(wh_ref[...], h_both[...],
                                 preferred_element_type=jnp.float32)
    act = jnp.maximum(pre, 0.0)          # relu
    h_cue_new = act[:, :P]               # cue hidden at this step
    mix_act = act[:, P:]                 # mix pre-modulation hidden

    # --- AttentionalGainModulation (op='mul'), gain from same-step cue hidden.
    #     AdaptiveAvgPool2d(spatial_size) is identity (same spatial size);
    #     match_channels (1x1 conv) == channel matmul.
    mod = (jnp.dot(wg_ref[...], h_cue_new, preferred_element_type=jnp.float32)
           + bg_ref[...])
    ag_bias = ag_ref[0]                  # scalar reads from SMEM
    ag_slope = ag_ref[1]
    ag_thr = ag_ref[2]
    gate = ag_bias + (1.0 - ag_bias) * jax.nn.sigmoid((mod - ag_thr) * ag_slope)
    h_mix_new = mix_act * gate

    h_both[:, :P] = h_cue_new
    h_both[:, P:] = h_mix_new

    # --- classifier head on the final mix hidden only (loss_all_timesteps=False)
    @pl.when(t == num_t - 1)
    def _():
        # PyTorch NCHW flatten(1): flat[b, c*HW + s] = h_mix[c, b*HW + s].
        # Repack with lane-aligned VMEM copies, then one big matmul.
        for b in range(batch):
            for c in range(ch):
                flat_buf[b:b + 1, c * hw:(c + 1) * hw] = \
                    h_mix_new[c:c + 1, b * hw:(b + 1) * hw]
        h1 = jnp.maximum(
            jnp.dot(flat_buf[...], w1_ref[...],
                    preferred_element_type=jnp.float32) + b1_ref[...],
            0.0)                                            # Dropout == identity
        out_ref[...] = (jnp.dot(h1, w2_ref[...],
                                preferred_element_type=jnp.float32)
                        + b2_ref[...])


# ----------------------------------------------------------------------------
# Wrapper: layout plumbing only (param transposes are tiny & one-shot).
# ----------------------------------------------------------------------------
def qclevr_classifier_forward(cue, mix, params, num_steps):
    """cue, mix: NCHW [B, Cin, H, W] single-frame inputs (Conv2dEIRNN replicates
    4D inputs over time; here the frame simply stays VMEM-resident instead)."""
    B, Cin, H, W = cue.shape
    HW = H * W
    P = B * HW
    Ch = params["wx"].shape[1]
    D = params["fc1_w"].shape[1]
    K = params["fc2_w"].shape[1]

    def to_cp(x_nchw):  # NCHW -> (Cin, P); pixel p = b*H*W + h*W + w
        return jnp.transpose(x_nchw, (1, 0, 2, 3)).reshape(Cin, P)

    x_both = jnp.concatenate([to_cp(cue), to_cp(mix)], axis=1)  # (Cin, 2P)

    wx_t = params["wx"].T                      # (Ch, Cin)
    wh_t = params["wh"].T                      # (Ch, Ch)
    b_t = params["b"].T                        # (Ch, 1)
    wg_t = params["ag_w"].T                    # (Ch, Ch)
    bg_t = params["ag_b"].T                    # (Ch, 1)
    ag = params["ag_scalars"].reshape(3)       # [bias, slope, threshold] -> SMEM
    w1 = params["fc1_w"]                       # (Ch*HW, D) already NCHW-flatten order
    b1 = params["fc1_b"]                       # (1, D)
    w2 = params["fc2_w"]                       # (D, K)
    b2 = params["fc2_b"]                       # (1, K)

    kernel = functools.partial(_qclevr_fused_kernel,
                               batch=B, ch=Ch, hw=HW, pix=P)

    return pl.pallas_call(
        kernel,
        out_shape=jax.ShapeDtypeStruct((B, K), jnp.float32),
        grid_spec=pltpu.PrefetchScalarGridSpec(
            num_scalar_prefetch=0,
            grid=(num_steps,),
            in_specs=[
                pl.BlockSpec((Cin, 2 * P), lambda t: (0, 0)),   # [cue|mix] frame
                pl.BlockSpec((Ch, Cin), lambda t: (0, 0)),      # Wx^T
                pl.BlockSpec((Ch, Ch), lambda t: (0, 0)),       # Wh^T
                pl.BlockSpec((Ch, 1), lambda t: (0, 0)),        # b^T
                pl.BlockSpec((Ch, Ch), lambda t: (0, 0)),       # AG match_channels W^T
                pl.BlockSpec((Ch, 1), lambda t: (0, 0)),        # AG match_channels b^T
                pl.BlockSpec(memory_space=pltpu.MemorySpace.SMEM),  # AG scalars
                pl.BlockSpec((Ch * HW, D), lambda t: (0, 0)),   # fc1_w (as-is)
                pl.BlockSpec((1, D), lambda t: (0, 0)),         # fc1_b
                pl.BlockSpec((D, K), lambda t: (0, 0)),         # fc2_w
                pl.BlockSpec((1, K), lambda t: (0, 0)),         # fc2_b
            ],
            out_specs=pl.BlockSpec((B, K), lambda t: (0, 0)),
            scratch_shapes=[
                pltpu.VMEM((Ch, 2 * P), jnp.float32),    # [cue|mix] hidden (VMEM only)
                pltpu.VMEM((Ch, 2 * P), jnp.float32),    # precomputed input drive
                pltpu.VMEM((B, Ch * HW), jnp.float32),   # NCHW-flattened final hidden
            ],
        ),
        compiler_params=pltpu.CompilerParams(
            dimension_semantics=("arbitrary",)),
    )(x_both, wx_t, wh_t, b_t, wg_t, bg_t, ag, w1, b1, w2, b2)


# ----------------------------------------------------------------------------
# Pure-JAX reference (same simplified backbone) for a correctness check.
# ----------------------------------------------------------------------------
def _reference_forward(cue, mix, params, num_steps):
    hp = jax.lax.Precision.HIGHEST
    B, Cin, H, W = cue.shape
    P = B * H * W
    Ch = params["wx"].shape[1]
    x_cue = jnp.transpose(cue, (0, 2, 3, 1)).reshape(P, Cin)
    x_mix = jnp.transpose(mix, (0, 2, 3, 1)).reshape(P, Cin)
    ag_bias, ag_slope, ag_thr = params["ag_scalars"][0]
    h_cue = jnp.zeros((P, Ch), jnp.float32)
    h_mix = jnp.zeros((P, Ch), jnp.float32)
    for _ in range(num_steps):
        h_cue_new = jax.nn.relu(jnp.dot(x_cue, params["wx"], precision=hp)
                                + jnp.dot(h_cue, params["wh"], precision=hp)
                                + params["b"])
        pre = jax.nn.relu(jnp.dot(x_mix, params["wx"], precision=hp)
                          + jnp.dot(h_mix, params["wh"], precision=hp)
                          + params["b"])
        mod = jnp.dot(h_cue_new, params["ag_w"], precision=hp) + params["ag_b"]
        gate = ag_bias + (1.0 - ag_bias) * jax.nn.sigmoid((mod - ag_thr) * ag_slope)
        h_cue = h_cue_new
        h_mix = pre * gate
    h_last = h_mix.reshape(B, H, W, Ch)
    flat = jnp.transpose(h_last, (0, 3, 1, 2)).reshape(B, -1)   # NCHW flatten(1)
    h1 = jax.nn.relu(jnp.dot(flat, params["fc1_w"], precision=hp)
                     + params["fc1_b"])
    return jnp.dot(h1, params["fc2_w"], precision=hp) + params["fc2_b"]


# ----------------------------------------------------------------------------
if __name__ == "__main__":
    B, Cin, H, W = 2, 4, 16, 16
    Ch = 8                 # stand-in h_pyr_channels == out_channels
    T = 4                  # num_steps
    FC_DIM = 128
    NUM_CLASSES = 6

    key = jax.random.PRNGKey(0)
    ks = jax.random.split(key, 10)

    params = {
        # stand-in Conv2dEIRNN (1x1 conv recurrence)
        "wx": 0.1 * jax.random.normal(ks[0], (Cin, Ch), jnp.float32),
        "wh": 0.1 * jax.random.normal(ks[1], (Ch, Ch), jnp.float32),
        "b": 0.1 * jax.random.normal(ks[2], (1, Ch), jnp.float32),
        # AttentionalGainModulation: match_channels (1x1 conv) + bias/slope/threshold
        "ag_w": 0.1 * jax.random.normal(ks[3], (Ch, Ch), jnp.float32),
        "ag_b": 0.1 * jax.random.normal(ks[4], (1, Ch), jnp.float32),
        # [bias=0, slope=1, threshold=0]  (nn.Parameter init values)
        "ag_scalars": jnp.array([[0.0, 1.0, 0.0]], jnp.float32),
        # out_layer: Linear(Ch*H*W, fc_dim) -> ReLU -> Dropout -> Linear(fc_dim, 6)
        "fc1_w": 0.05 * jax.random.normal(ks[5], (Ch * H * W, FC_DIM), jnp.float32),
        "fc1_b": 0.05 * jax.random.normal(ks[6], (1, FC_DIM), jnp.float32),
        "fc2_w": 0.05 * jax.random.normal(ks[7], (FC_DIM, NUM_CLASSES), jnp.float32),
        "fc2_b": 0.05 * jax.random.normal(ks[8], (1, NUM_CLASSES), jnp.float32),
    }

    cue = jax.random.normal(ks[9], (B, Cin, H, W), jnp.float32)
    mix = cue + 0.5  # deterministic second stream

    pred = qclevr_classifier_forward(cue, mix, params, num_steps=T)
    jax.block_until_ready(pred)
    assert pred.shape == (B, NUM_CLASSES)

    ref = _reference_forward(cue, mix, params, num_steps=T)
    max_err = float(jnp.max(jnp.abs(pred - ref)))
    assert max_err < 1e-2, f"mismatch vs reference: {max_err}"

    print("KERNEL_OK")
</pallas_src>

<mosaic_0001>
module attributes {stable_mosaic.version = 11 : i64} {
  func.func @_qclevr_fused_kernel(%arg0: i32, %arg1: memref<4x1024xf32, #tpu.memory_space<vmem>>, %arg2: memref<8x4xf32, #tpu.memory_space<vmem>>, %arg3: memref<8x8xf32, #tpu.memory_space<vmem>>, %arg4: memref<8x1xf32, #tpu.memory_space<vmem>>, %arg5: memref<8x8xf32, #tpu.memory_space<vmem>>, %arg6: memref<8x1xf32, #tpu.memory_space<vmem>>, %arg7: memref<3xf32, #tpu.memory_space<smem>>, %arg8: memref<2048x128xf32, #tpu.memory_space<vmem>>, %arg9: memref<1x128xf32, #tpu.memory_space<vmem>>, %arg10: memref<128x6xf32, #tpu.memory_space<vmem>>, %arg11: memref<1x6xf32, #tpu.memory_space<vmem>>, %arg12: memref<2x6xf32, #tpu.memory_space<vmem>>, %arg13: memref<8x1024xf32, #tpu.memory_space<vmem>>, %arg14: memref<8x1024xf32, #tpu.memory_space<vmem>>, %arg15: memref<2x2048xf32, #tpu.memory_space<vmem>>) attributes {dimension_semantics = [#tpu.dimension_semantics<arbitrary>], iteration_bounds = array<i64: 4>, scalar_prefetch = 0 : i64, scratch_operands = 3 : i64, tpu.core_type = #tpu.core_type<tc>, window_params = [{pipeline_mode = #tpu.pipeline_mode<synchronous>, transform_indices = @transform_0, window_bounds = array<i64: 4, 1024>}, {pipeline_mode = #tpu.pipeline_mode<synchronous>, transform_indices = @transform_1, window_bounds = array<i64: 8, 4>}, {pipeline_mode = #tpu.pipeline_mode<synchronous>, transform_indices = @transform_2, window_bounds = array<i64: 8, 8>}, {pipeline_mode = #tpu.pipeline_mode<synchronous>, transform_indices = @transform_3, window_bounds = array<i64: 8, 1>}, {pipeline_mode = #tpu.pipeline_mode<synchronous>, transform_indices = @transform_4, window_bounds = array<i64: 8, 8>}, {pipeline_mode = #tpu.pipeline_mode<synchronous>, transform_indices = @transform_5, window_bounds = array<i64: 8, 1>}, {transform_indices = @transform_6, window_bounds = array<i64: 3>}, {pipeline_mode = #tpu.pipeline_mode<synchronous>, transform_indices = @transform_7, window_bounds = array<i64: 2048, 128>}, {pipeline_mode = #tpu.pipeline_mode<synchronous>, transform_indices = @transform_8, window_bounds = array<i64: 1, 128>}, {pipeline_mode = #tpu.pipeline_mode<synchronous>, transform_indices = @transform_9, window_bounds = array<i64: 128, 6>}, {pipeline_mode = #tpu.pipeline_mode<synchronous>, transform_indices = @transform_10, window_bounds = array<i64: 1, 6>}, {pipeline_mode = #tpu.pipeline_mode<synchronous>, transform_indices = @transform_11, window_bounds = array<i64: 2, 6>}]} {
    %c0_i32 = arith.constant 0 : i32
    %0 = arith.cmpi eq, %arg0, %c0_i32 : i32
    %1 = arith.extui %0 : i1 to i32
    %c0_i32_0 = arith.constant 0 : i32
    %2 = arith.cmpi ne, %1, %c0_i32_0 : i32
    scf.if %2 {
      %cst_19 = arith.constant 0.000000e+00 : f32
      %40 = vector.broadcast %cst_19 : f32 to vector<8x1024xf32>
      %c0_20 = arith.constant 0 : index
      %c0_21 = arith.constant 0 : index
      %41 = vector.load %arg13[%c0_20, %c0_21] : memref<8x1024xf32, #tpu.memory_space<vmem>>, vector<8x1024xf32>
      tpu.vector_store %arg13[%c0_20, %c0_21], %40 {strides = array<i32>} : memref<8x1024xf32, #tpu.memory_space<vmem>>, vector<8x1024xf32>,
      %c0_22 = arith.constant 0 : index
      %c0_23 = arith.constant 0 : index
      %42 = vector.load %arg2[%c0_22, %c0_23] : memref<8x4xf32, #tpu.memory_space<vmem>>, vector<8x4xf32>
      %c0_24 = arith.constant 0 : index
      %c0_25 = arith.constant 0 : index
      %43 = vector.load %arg1[%c0_24, %c0_25] : memref<4x1024xf32, #tpu.memory_space<vmem>>, vector<4x1024xf32>
      %cst_26 = arith.constant dense<0.000000e+00> : vector<8x1024xf32>
      %44 = tpu.matmul %42, %43, %cst_26 {dimension_numbers = #tpu.dot_dimension_numbers<[1], [0], [0], [1], [0, 0, 1, 1], [], []>} : vector<8x4xf32>, vector<4x1024xf32>, vector<8x1024xf32> -> vector<8x1024xf32>
      %c0_27 = arith.constant 0 : index
      %c0_28 = arith.constant 0 : index
      %45 = vector.load %arg4[%c0_27, %c0_28] : memref<8x1xf32, #tpu.memory_space<vmem>>, vector<8x1xf32>
      %46 = vector.broadcast %45 : vector<8x1xf32> to vector<8x1024xf32>
      %47 = arith.addf %44, %46 : vector<8x1024xf32>
      %c0_29 = arith.constant 0 : index
      %c0_30 = arith.constant 0 : index
      %48 = vector.load %arg14[%c0_29, %c0_30] : memref<8x1024xf32, #tpu.memory_space<vmem>>, vector<8x1024xf32>
      tpu.vector_store %arg14[%c0_29, %c0_30], %47 {strides = array<i32>} : memref<8x1024xf32, #tpu.memory_space<vmem>>, vector<8x1024xf32>,
    } else {
    }
    %c0 = arith.constant 0 : index
    %c0_1 = arith.constant 0 : index
    %3 = vector.load %arg14[%c0, %c0_1] : memref<8x1024xf32, #tpu.memory_space<vmem>>, vector<8x1024xf32>
    %c0_2 = arith.constant 0 : index
    %c0_3 = arith.constant 0 : index
    %4 = vector.load %arg3[%c0_2, %c0_3] : memref<8x8xf32, #tpu.memory_space<vmem>>, vector<8x8xf32>
    %c0_4 = arith.constant 0 : index
    %c0_5 = arith.constant 0 : index
    %5 = vector.load %arg13[%c0_4, %c0_5] : memref<8x1024xf32, #tpu.memory_space<vmem>>, vector<8x1024xf32>
    %cst = arith.constant dense<0.000000e+00> : vector<8x1024xf32>
    %6 = tpu.matmul %4, %5, %cst {dimension_numbers = #tpu.dot_dimension_numbers<[1], [0], [0], [1], [0, 0, 1, 1], [], []>} : vector<8x8xf32>, vector<8x1024xf32>, vector<8x1024xf32> -> vector<8x1024xf32>
    %7 = arith.addf %3, %6 : vector<8x1024xf32>
    %cst_6 = arith.constant 0.000000e+00 : f32
    %8 = vector.broadcast %cst_6 : f32 to vector<8x1024xf32>
    %9 = arith.maximumf %7, %8 : vector<8x1024xf32>
    %10 = vector.extract_strided_slice %9 {offsets = [0, 0], sizes = [8, 512], strides = [1, 1]} : vector<8x1024xf32> to vector<8x512xf32>
    %11 = vector.extract_strided_slice %9 {offsets = [0, 512], sizes = [8, 512], strides = [1, 1]} : vector<8x1024xf32> to vector<8x512xf32>
    %c0_7 = arith.constant 0 : index
    %c0_8 = arith.constant 0 : index
    %12 = vector.load %arg5[%c0_7, %c0_8] : memref<8x8xf32, #tpu.memory_space<vmem>>, vector<8x8xf32>
    %cst_9 = arith.constant dense<0.000000e+00> : vector<8x512xf32>
    %13 = tpu.matmul %12, %10, %cst_9 {dimension_numbers = #tpu.dot_dimension_numbers<[1], [0], [0], [1], [0, 0, 1, 1], [], []>} : vector<8x8xf32>, vector<8x512xf32>, vector<8x512xf32> -> vector<8x512xf32>
    %c0_10 = arith.constant 0 : index
    %c0_11 = arith.constant 0 : index
    %14 = vector.load %arg6[%c0_10, %c0_11] : memref<8x1xf32, #tpu.memory_space<vmem>>, vector<8x1xf32>
    %15 = vector.broadcast %14 : vector<8x1xf32> to vector<8x512xf32>
    %16 = arith.addf %13, %15 : vector<8x512xf32>
    %c0_12 = arith.constant 0 : index
    %17 = memref.load %arg7[%c0_12] : memref<3xf32, #tpu.memory_space<smem>>
    %c1 = arith.constant 1 : index
    %18 = memref.load %arg7[%c1] : memref<3xf32, #tpu.memory_space<smem>>
    %c2 = arith.constant 2 : index
    %19 = memref.load %arg7[%c2] : memref<3xf32, #tpu.memory_space<smem>>
    %cst_13 = arith.constant 1.000000e+00 : f32
    %20 = arith.subf %cst_13, %17 : f32
    %21 = vector.broadcast %19 : f32 to vector<8x512xf32>
    %22 = arith.subf %16, %21 : vector<8x512xf32>
    %23 = vector.broadcast %18 : f32 to vector<8x512xf32>
    %24 = arith.mulf %22, %23 : vector<8x512xf32>
    %25 = arith.negf %24 : vector<8x512xf32>
    %26 = math.exp %25 : vector<8x512xf32>
    %cst_14 = arith.constant 1.000000e+00 : f32
    %27 = vector.broadcast %cst_14 : f32 to vector<8x512xf32>
    %28 = arith.addf %27, %26 : vector<8x512xf32>
    %29 = arith.divf %27, %28 : vector<8x512xf32>
    %30 = vector.broadcast %20 : f32 to vector<8x512xf32>
    %31 = arith.mulf %30, %29 : vector<8x512xf32>
    %32 = vector.broadcast %17 : f32 to vector<8x512xf32>
    %33 = arith.addf %32, %31 : vector<8x512xf32>
    %34 = arith.mulf %11, %33 : vector<8x512xf32>
    %c0_15 = arith.constant 0 : index
    %c0_16 = arith.constant 0 : index
    %35 = vector.load %arg13[%c0_15, %c0_16] : memref<8x1024xf32, #tpu.memory_space<vmem>>, vector<8x512xf32>
    tpu.vector_store %arg13[%c0_15, %c0_16], %10 {strides = array<i32>} : memref<8x1024xf32, #tpu.memory_space<vmem>>, vector<8x512xf32>,
    %c0_17 = arith.constant 0 : index
    %c512 = arith.constant 512 : index
    %36 = vector.load %arg13[%c0_17, %c512] : memref<8x1024xf32, #tpu.memory_space<vmem>>, vector<8x512xf32>
    tpu.vector_store %arg13[%c0_17, %c512], %34 {strides = array<i32>} : memref<8x1024xf32, #tpu.memory_space<vmem>>, vector<8x512xf32>,
    %c3_i32 = arith.constant 3 : i32
    %37 = arith.cmpi eq, %arg0, %c3_i32 : i32
    %38 = arith.extui %37 : i1 to i32
    %c0_i32_18 = arith.constant 0 : i32
    %39 = arith.cmpi ne, %38, %c0_i32_18 : i32
    scf.if %39 {
      %40 = vector.extract_strided_slice %34 {offsets = [0, 0], sizes = [1, 256], strides = [1, 1]} : vector<8x512xf32> to vector<1x256xf32>
      %c0_19 = arith.constant 0 : index
      %c0_20 = arith.constant 0 : index
      %41 = vector.load %arg15[%c0_19, %c0_20] : memref<2x2048xf32, #tpu.memory_space<vmem>>, vector<1x256xf32>
      tpu.vector_store %arg15[%c0_19, %c0_20], %40 {strides = array<i32>} : memref<2x2048xf32, #tpu.memory_space<vmem>>, vector<1x256xf32>,
      %42 = vector.extract_strided_slice %34 {offsets = [1, 0], sizes = [1, 256], strides = [1, 1]} : vector<8x512xf32> to vector<1x256xf32>
      %c0_21 = arith.constant 0 : index
      %c256 = arith.constant 256 : index
      %43 = vector.load %arg15[%c0_21, %c256] : memref<2x2048xf32, #tpu.memory_space<vmem>>, vector<1x256xf32>
      tpu.vector_store %arg15[%c0_21, %c256], %42 {strides = array<i32>} : memref<2x2048xf32, #tpu.memory_space<vmem>>, vector<1x256xf32>,
      %44 = vector.extract_strided_slice %34 {offsets = [2, 0], sizes = [1, 256], strides = [1, 1]} : vector<8x512xf32> to vector<1x256xf32>
      %c0_22 = arith.constant 0 : index
      %c512_23 = arith.constant 512 : index
      %45 = vector.load %arg15[%c0_22, %c512_23] : memref<2x2048xf32, #tpu.memory_space<vmem>>, vector<1x256xf32>
      tpu.vector_store %arg15[%c0_22, %c512_23], %44 {strides = array<i32>} : memref<2x2048xf32, #tpu.memory_space<vmem>>, vector<1x256xf32>,
      %46 = vector.extract_strided_slice %34 {offsets = [3, 0], sizes = [1, 256], strides = [1, 1]} : vector<8x512xf32> to vector<1x256xf32>
      %c0_24 = arith.constant 0 : index
      %c768 = arith.constant 768 : index
      %47 = vector.load %arg15[%c0_24, %c768] : memref<2x2048xf32, #tpu.memory_space<vmem>>, vector<1x256xf32>
      tpu.vector_store %arg15[%c0_24, %c768], %46 {strides = array<i32>} : memref<2x2048xf32, #tpu.memory_space<vmem>>, vector<1x256xf32>,
      %48 = vector.extract_strided_slice %34 {offsets = [4, 0], sizes = [1, 256], strides = [1, 1]} : vector<8x512xf32> to vector<1x256xf32>
      %c0_25 = arith.constant 0 : index
      %c1024 = arith.constant 1024 : index
      %49 = vector.load %arg15[%c0_25, %c1024] : memref<2x2048xf32, #tpu.memory_space<vmem>>, vector<1x256xf32>
      tpu.vector_store %arg15[%c0_25, %c1024], %48 {strides = array<i32>} : memref<2x2048xf32, #tpu.memory_space<vmem>>, vector<1x256xf32>,
      %50 = vector.extract_strided_slice %34 {offsets = [5, 0], sizes = [1, 256], strides = [1, 1]} : vector<8x512xf32> to vector<1x256xf32>
      %c0_26 = arith.constant 0 : index
      %c1280 = arith.constant 1280 : index
      %51 = vector.load %arg15[%c0_26, %c1280] : memref<2x2048xf32, #tpu.memory_space<vmem>>, vector<1x256xf32>
      tpu.vector_store %arg15[%c0_26, %c1280], %50 {strides = array<i32>} : memref<2x2048xf32, #tpu.memory_space<vmem>>, vector<1x256xf32>,
      %52 = vector.extract_strided_slice %34 {offsets = [6, 0], sizes = [1, 256], strides = [1, 1]} : vector<8x512xf32> to vector<1x256xf32>
      %c0_27 = arith.constant 0 : index
      %c1536 = arith.constant 1536 : index
      %53 = vector.load %arg15[%c0_27, %c1536] : memref<2x2048xf32, #tpu.memory_space<vmem>>, vector<1x256xf32>
      tpu.vector_store %arg15[%c0_27, %c1536], %52 {strides = array<i32>} : memref<2x2048xf32, #tpu.memory_space<vmem>>, vector<1x256xf32>,
      %54 = vector.extract_strided_slice %34 {offsets = [7, 0], sizes = [1, 256], strides = [1, 1]} : vector<8x512xf32> to vector<1x256xf32>
      %c0_28 = arith.constant 0 : index
      %c1792 = arith.constant 1792 : index
      %55 = vector.load %arg15[%c0_28, %c1792] : memref<2x2048xf32, #tpu.memory_space<vmem>>, vector<1x256xf32>
      tpu.vector_store %arg15[%c0_28, %c1792], %54 {strides = array<i32>} : memref<2x2048xf32, #tpu.memory_space<vmem>>, vector<1x256xf32>,
      %56 = vector.extract_strided_slice %34 {offsets = [0, 256], sizes = [1, 256], strides = [1, 1]} : vector<8x512xf32> to vector<1x256xf32>
      %c1_29 = arith.constant 1 : index
      %c0_30 = arith.constant 0 : index
      %57 = vector.load %arg15[%c1_29, %c0_30] : memref<2x2048xf32, #tpu.memory_space<vmem>>, vector<1x256xf32>
      tpu.vector_store %arg15[%c1_29, %c0_30], %56 {strides = array<i32>} : memref<2x2048xf32, #tpu.memory_space<vmem>>, vector<1x256xf32>,
      %58 = vector.extract_strided_slice %34 {offsets = [1, 256], sizes = [1, 256], strides = [1, 1]} : vector<8x512xf32> to vector<1x256xf32>
      %c1_31 = arith.constant 1 : index
      %c256_32 = arith.constant 256 : index
      %59 = vector.load %arg15[%c1_31, %c256_32] : memref<2x2048xf32, #tpu.memory_space<vmem>>, vector<1x256xf32>
      tpu.vector_store %arg15[%c1_31, %c256_32], %58 {strides = array<i32>} : memref<2x2048xf32, #tpu.memory_space<vmem>>, vector<1x256xf32>,
      %60 = vector.extract_strided_slice %34 {offsets = [2, 256], sizes = [1, 256], strides = [1, 1]} : vector<8x512xf32> to vector<1x256xf32>
      %c1_33 = arith.constant 1 : index
      %c512_34 = arith.constant 512 : index
      %61 = vector.load %arg15[%c1_33, %c512_34] : memref<2x2048xf32, #tpu.memory_space<vmem>>, vector<1x256xf32>
      tpu.vector_store %arg15[%c1_33, %c512_34], %60 {strides = array<i32>} : memref<2x2048xf32, #tpu.memory_space<vmem>>, vector<1x256xf32>,
      %62 = vector.extract_strided_slice %34 {offsets = [3, 256], sizes = [1, 256], strides = [1, 1]} : vector<8x512xf32> to vector<1x256xf32>
      %c1_35 = arith.constant 1 : index
      %c768_36 = arith.constant 768 : index
      %63 = vector.load %arg15[%c1_35, %c768_36] : memref<2x2048xf32, #tpu.memory_space<vmem>>, vector<1x256xf32>
      tpu.vector_store %arg15[%c1_35, %c768_36], %62 {strides = array<i32>} : memref<2x2048xf32, #tpu.memory_space<vmem>>, vector<1x256xf32>,
      %64 = vector.extract_strided_slice %34 {offsets = [4, 256], sizes = [1, 256], strides = [1, 1]} : vector<8x512xf32> to vector<1x256xf32>
      %c1_37 = arith.constant 1 : index
      %c1024_38 = arith.constant 1024 : index
      %65 = vector.load %arg15[%c1_37, %c1024_38] : memref<2x2048xf32, #tpu.memory_space<vmem>>, vector<1x256xf32>
      tpu.vector_store %arg15[%c1_37, %c1024_38], %64 {strides = array<i32>} : memref<2x2048xf32, #tpu.memory_space<vmem>>, vector<1x256xf32>,
      %66 = vector.extract_strided_slice %34 {offsets = [5, 256], sizes = [1, 256], strides = [1, 1]} : vector<8x512xf32> to vector<1x256xf32>
      %c1_39 = arith.constant 1 : index
      %c1280_40 = arith.constant 1280 : index
      %67 = vector.load %arg15[%c1_39, %c1280_40] : memref<2x2048xf32, #tpu.memory_space<vmem>>, vector<1x256xf32>
      tpu.vector_store %arg15[%c1_39, %c1280_40], %66 {strides = array<i32>} : memref<2x2048xf32, #tpu.memory_space<vmem>>, vector<1x256xf32>,
      %68 = vector.extract_strided_slice %34 {offsets = [6, 256], sizes = [1, 256], strides = [1, 1]} : vector<8x512xf32> to vector<1x256xf32>
      %c1_41 = arith.constant 1 : index
      %c1536_42 = arith.constant 1536 : index
      %69 = vector.load %arg15[%c1_41, %c1536_42] : memref<2x2048xf32, #tpu.memory_space<vmem>>, vector<1x256xf32>
      tpu.vector_store %arg15[%c1_41, %c1536_42], %68 {strides = array<i32>} : memref<2x2048xf32, #tpu.memory_space<vmem>>, vector<1x256xf32>,
      %70 = vector.extract_strided_slice %34 {offsets = [7, 256], sizes = [1, 256], strides = [1, 1]} : vector<8x512xf32> to vector<1x256xf32>
      %c1_43 = arith.constant 1 : index
      %c1792_44 = arith.constant 1792 : index
      %71 = vector.load %arg15[%c1_43, %c1792_44] : memref<2x2048xf32, #tpu.memory_space<vmem>>, vector<1x256xf32>
      tpu.vector_store %arg15[%c1_43, %c1792_44], %70 {strides = array<i32>} : memref<2x2048xf32, #tpu.memory_space<vmem>>, vector<1x256xf32>,
      %c0_45 = arith.constant 0 : index
      %c0_46 = arith.constant 0 : index
      %72 = vector.load %arg15[%c0_45, %c0_46] : memref<2x2048xf32, #tpu.memory_space<vmem>>, vector<2x2048xf32>
      %c0_47 = arith.constant 0 : index
      %c0_48 = arith.constant 0 : index
      %73 = vector.load %arg8[%c0_47, %c0_48] : memref<2048x128xf32, #tpu.memory_space<vmem>>, vector<2048x128xf32>
      %cst_49 = arith.constant dense<0.000000e+00> : vector<2x128xf32>
      %74 = tpu.matmul %72, %73, %cst_49 {dimension_numbers = #tpu.dot_dimension_numbers<[1], [0], [0], [1], [0, 0, 1, 1], [], []>} : vector<2x2048xf32>, vector<2048x128xf32>, vector<2x128xf32> -> vector<2x128xf32>
      %c0_50 = arith.constant 0 : index
      %c0_51 = arith.constant 0 : index
      %75 = vector.load %arg9[%c0_50, %c0_51] : memref<1x128xf32, #tpu.memory_space<vmem>>, vector<1x128xf32>
      %76 = vector.broadcast %75 : vector<1x128xf32> to vector<2x128xf32>
      %77 = arith.addf %74, %76 : vector<2x128xf32>
      %cst_52 = arith.constant 0.000000e+00 : f32
      %78 = vector.broadcast %cst_52 : f32 to vector<2x128xf32>
      %79 = arith.maximumf %77, %78 : vector<2x128xf32>
      %c0_53 = arith.constant 0 : index
      %c0_54 = arith.constant 0 : index
      %80 = vector.load %arg10[%c0_53, %c0_54] : memref<128x6xf32, #tpu.memory_space<vmem>>, vector<128x6xf32>
      %cst_55 = arith.constant dense<0.000000e+00> : vector<2x6xf32>
      %81 = tpu.matmul %79, %80, %cst_55 {dimension_numbers = #tpu.dot_dimension_numbers<[1], [0], [0], [1], [0, 0, 1, 1], [], []>} : vector<2x128xf32>, vector<128x6xf32>, vector<2x6xf32> -> vector<2x6xf32>
      %c0_56 = arith.constant 0 : index
      %c0_57 = arith.constant 0 : index
      %82 = vector.load %arg11[%c0_56, %c0_57] : memref<1x6xf32, #tpu.memory_space<vmem>>, vector<1x6xf32>
      %83 = vector.broadcast %82 : vector<1x6xf32> to vector<2x6xf32>
      %84 = arith.addf %81, %83 : vector<2x6xf32>
      %c0_58 = arith.constant 0 : index
      %c0_59 = arith.constant 0 : index
      %85 = vector.load %arg12[%c0_58, %c0_59] : memref<2x6xf32, #tpu.memory_space<vmem>>, vector<2x6xf32>
      tpu.vector_store %arg12[%c0_58, %c0_59], %84 {strides = array<i32>} : memref<2x6xf32, #tpu.memory_space<vmem>>, vector<2x6xf32>,
    } else {
    }
    return
  }
  func.func @transform_0(%arg0: i32) -> (i32, i32) {
    %c0_i32 = arith.constant 0 : i32
    %c0_i32_0 = arith.constant 0 : i32
    %c0_i32_1 = arith.constant 0 : i32
    return %c0_i32, %c0_i32_0 : i32, i32
  }
  func.func @transform_1(%arg0: i32) -> (i32, i32) {
    %c0_i32 = arith.constant 0 : i32
    %c0_i32_0 = arith.constant 0 : i32
    %c0_i32_1 = arith.constant 0 : i32
    return %c0_i32, %c0_i32_0 : i32, i32
  }
  func.func @transform_2(%arg0: i32) -> (i32, i32) {
    %c0_i32 = arith.constant 0 : i32
    %c0_i32_0 = arith.constant 0 : i32
    %c0_i32_1 = arith.constant 0 : i32
    return %c0_i32, %c0_i32_0 : i32, i32
  }
  func.func @transform_3(%arg0: i32) -> (i32, i32) {
    %c0_i32 = arith.constant 0 : i32
    %c0_i32_0 = arith.constant 0 : i32
    %c0_i32_1 = arith.constant 0 : i32
    return %c0_i32, %c0_i32_0 : i32, i32
  }
  func.func @transform_4(%arg0: i32) -> (i32, i32) {
    %c0_i32 = arith.constant 0 : i32
    %c0_i32_0 = arith.constant 0 : i32
    %c0_i32_1 = arith.constant 0 : i32
    return %c0_i32, %c0_i32_0 : i32, i32
  }
  func.func @transform_5(%arg0: i32) -> (i32, i32) {
    %c0_i32 = arith.constant 0 : i32
    %c0_i32_0 = arith.constant 0 : i32
    %c0_i32_1 = arith.constant 0 : i32
    return %c0_i32, %c0_i32_0 : i32, i32
  }
  func.func @transform_6(%arg0: i32) -> i32 {
    %c0_i32 = arith.constant 0 : i32
    %c0_i32_0 = arith.constant 0 : i32
    return %c0_i32 : i32
  }
  func.func @transform_7(%arg0: i32) -> (i32, i32) {
    %c0_i32 = arith.constant 0 : i32
    %c0_i32_0 = arith.constant 0 : i32
    %c0_i32_1 = arith.constant 0 : i32
    return %c0_i32, %c0_i32_0 : i32, i32
  }
  func.func @transform_8(%arg0: i32) -> (i32, i32) {
    %c0_i32 = arith.constant 0 : i32
    %c0_i32_0 = arith.constant 0 : i32
    %c0_i32_1 = arith.constant 0 : i32
    return %c0_i32, %c0_i32_0 : i32, i32
  }
  func.func @transform_9(%arg0: i32) -> (i32, i32) {
    %c0_i32 = arith.constant 0 : i32
    %c0_i32_0 = arith.constant 0 : i32
    %c0_i32_1 = arith.constant 0 : i32
    return %c0_i32, %c0_i32_0 : i32, i32
  }
  func.func @transform_10(%arg0: i32) -> (i32, i32) {
    %c0_i32 = arith.constant 0 : i32
    %c0_i32_0 = arith.constant 0 : i32
    %c0_i32_1 = arith.constant 0 : i32
    return %c0_i32, %c0_i32_0 : i32, i32
  }
  func.func @transform_11(%arg0: i32) -> (i32, i32) {
    %c0_i32 = arith.constant 0 : i32
    %c0_i32_0 = arith.constant 0 : i32
    %c0_i32_1 = arith.constant 0 : i32
    return %c0_i32, %c0_i32_0 : i32, i32
  }
}

</mosaic_0001>

<llo_original>
// kernel: tpu_custom_call.1
$region0: #{tpu_custom_call.1}
  #allocation0 [shape = 'u32[]', space=smem, size = 0x4, offset = 0x4, fixed_abs, tag = 'smem constant byte address 0x4 - core index']
  #allocation1 [shape = 'u32[144,128]{1,0:T(1,128)}', space=vmem, size = 0x12000, scoped, tag = 'internal scratch']
  #allocation2 [shape = 'f32[8,1024]{1,0:T(8,128)}', space=vmem, size = 0x8000, scoped, tag = 'scratch operand']
  #allocation3 [shape = 'f32[8,1024]{1,0:T(8,128)}', space=vmem, size = 0x8000, scoped, tag = 'scratch operand']
  #allocation4 [shape = 'f32[2,2048]{1,0:T(2,128)}', space=vmem, size = 0x4000, scoped, tag = 'scratch operand']
  %s0 = inlined_call_operand.vmem [shape: f32[4,1024], index: 0, kind: input, shape index: {}]
  %s1 = inlined_call_operand.vmem [shape: f32[8,4], index: 1, kind: input, shape index: {}]
  %s2 = inlined_call_operand.vmem [shape: f32[8,8], index: 2, kind: input, shape index: {}]
  %s3 = inlined_call_operand.vmem [shape: f32[8,1], index: 3, kind: input, shape index: {}]
  %s4 = inlined_call_operand.vmem [shape: f32[8,8], index: 4, kind: input, shape index: {}]
  %s5 = inlined_call_operand.vmem [shape: f32[8,1], index: 5, kind: input, shape index: {}]
  %s6 = inlined_call_operand.vmem [shape: f32[3], index: 6, kind: input, shape index: {}]
  %s7 = inlined_call_operand.hbm [shape: f32[2048,128], index: 7, kind: input, shape index: {}]
  %s8 = inlined_call_operand.vmem [shape: f32[1,128], index: 8, kind: input, shape index: {}]
  %s9 = inlined_call_operand.vmem [shape: f32[128,6], index: 9, kind: input, shape index: {}]
  %s10 = inlined_call_operand.vmem [shape: f32[1,6], index: 10, kind: input, shape index: {}]
  %s11 = inlined_call_operand.hbm [shape: f32[2,6], index: 11, kind: output, shape index: {}]
  %s12 = sld [smem:[#allocation0]]
  $region93: #{tpu_custom_call.1} parent=0
    _
  %s14 = ssub.s32 1, %s12
  %s15 = scalar_select 0, %s14, %s12
  $region1: #{tpu_custom_call.1} parent=0
    #allocation5 [shape = 'u8[512]{0}', space=smem, size = 0x200, scoped, tag = 'input window, operand 6, single buffered']
    #allocation6 [shape = 's32[2]{0}', space=sflag, size = 0x8, scoped, tag = 'scoped memory for tpu_custom_call.1']
    #allocation7 [shape = 's32[2]{0}', space=sflag, size = 0x8, scoped, tag = 'scoped memory for tpu_custom_call.1']
    #allocation8 [shape = 's32[2]{0}', space=sflag, size = 0x8, scoped, tag = 'scoped memory for tpu_custom_call.1']
    #allocation9 [shape = 'u8[1048576]{0}', space=vmem, size = 0x100000, scoped, tag = 'input window, operand 7, single buffered']
    #allocation10 [shape = 'u8[1024]{0}', space=vmem, size = 0x400, scoped, tag = 'output window, operand 0, single buffered']
    %16 = vsyncpa [#allocation8], 0
    %17 = vsyncpa [#allocation6], 0
    %18 = vsyncpa [#allocation7], 0
    loop: start=0, step=1, limit=6
    $region2: #{tpu_custom_call.1} parent=1 // loop_pre_header
      _
    $region3: #{tpu_custom_call.1} parent=1 // loop_header
      %s20 = sphi 0, %s24
      %p21 = scmp.ge.s32.totalorder %s20, 6
      %s28 = sphi 0, %s28
      %s30 = sphi 0, %s28
      %s31 = sphi 0, %s30
      %s45 = sphi 0, %s31
      %s49 = sphi 0, %s49
      %s51 = sphi 0, %s49
      %s52 = sphi 0, %s51
      %s66 = sphi 0, %s52
      %s70 = sphi 0, %s70
      %s72 = sphi 0, %s70
      %s73 = sphi 0, %s72
      %s87 = sphi 0, %s73
      %s91 = sphi 0, %s91
      %s93 = sphi 0, %s91
      %s94 = sphi 0, %s93
      %s108 = sphi 0, %s94
      %s112 = sphi 0, %s112
      %s114 = sphi 0, %s112
      %s115 = sphi 0, %s114
      %s129 = sphi 0, %s115
      %s133 = sphi 0, %s133
      %s135 = sphi 0, %s133
      %s136 = sphi 0, %s135
      %s150 = sphi 0, %s136
      %s154 = sphi 0, %s154
      %s156 = sphi 0, %s154
      %s157 = sphi 0, %s156
      %s171 = sphi 0, %s157
      %s175 = sphi 0, %s175
      %s177 = sphi 0, %s175
      %s178 = sphi 0, %s177
      %s192 = sphi 0, %s178
      %s196 = sphi 0, %s196
      %s198 = sphi 0, %s196
      %s199 = sphi 0, %s198
      %s213 = sphi 0, %s199
      %s217 = sphi 0, %s217
      %s219 = sphi 0, %s217
      %s220 = sphi 0, %s219
      %s234 = sphi 0, %s220
      %s238 = sphi 0, %s238
      %s240 = sphi 0, %s238
      %s241 = sphi 0, %s240
      %s255 = sphi 0, %s241
      %s259 = sphi 0, %s259
      %s261 = sphi 0, %s259
      %s262 = sphi 0, %s261
      %s276 = sphi 0, %s262
    $region4: #{tpu_custom_call.1} parent=1 // loop_header_branch
      %23 = sbr.rel (%p21) target = $region8
    $region5: #{tpu_custom_call.1} parent=1 // loop_body
      %s25 = ssub.s32 %s20, 1
      %s26 = ssub.s32 %s20, 2
      %s27 = sadd.s32 %s20, 1
      %s29 = sadd.s32 %s28, 1
      %p32 = scmp.eq.s32.totalorder %s20, 3
      %p33 = scmp.ne.s32.totalorder %s28, %s30
      %p34 = scmp.eq.s32.totalorder %s20, 0
      %p35 = por %p33, %p34
      %p36 = scmp.ne.s32.totalorder %s28, %s30
      %p37 = scmp.eq.s32.totalorder %s25, 3
      %p38 = por %p36, %p37
      %p39 = scmp.ne.s32.totalorder %s30, %s31
      %p40 = scmp.eq.s32.totalorder %s25, 0
      %p41 = por %p39, %p40
      %p42 = scmp.ne.s32.totalorder %s30, %s31
      %p43 = scmp.eq.s32.totalorder %s26, 3
      %p44 = por %p42, %p43
      %p46 = scmp.ne.s32.totalorder %s31, %s45
      %p47 = scmp.eq.s32.totalorder %s26, 0
      %p48 = por %p46, %p47
      %s50 = sadd.s32 %s49, 1
      %p53 = scmp.eq.s32.totalorder %s20, 3
      %p54 = scmp.ne.s32.totalorder %s49, %s51
      %p55 = scmp.eq.s32.totalorder %s20, 0
      %p56 = por %p54, %p55
      %p57 = scmp.ne.s32.totalorder %s49, %s51
      %p58 = scmp.eq.s32.totalorder %s25, 3
      %p59 = por %p57, %p58
      %p60 = scmp.ne.s32.totalorder %s51, %s52
      %p61 = scmp.eq.s32.totalorder %s25, 0
      %p62 = por %p60, %p61
      %p63 = scmp.ne.s32.totalorder %s51, %s52
      %p64 = scmp.eq.s32.totalorder %s26, 3
      %p65 = por %p63, %p64
      %p67 = scmp.ne.s32.totalorder %s52, %s66
      %p68 = scmp.eq.s32.totalorder %s26, 0
      %p69 = por %p67, %p68
      %s71 = sadd.s32 %s70, 1
      %p74 = scmp.eq.s32.totalorder %s20, 3
      %p75 = scmp.ne.s32.totalorder %s70, %s72
      %p76 = scmp.eq.s32.totalorder %s20, 0
      %p77 = por %p75, %p76
      %p78 = scmp.ne.s32.totalorder %s70, %s72
      %p79 = scmp.eq.s32.totalorder %s25, 3
      %p80 = por %p78, %p79
      %p81 = scmp.ne.s32.totalorder %s72, %s73
      %p82 = scmp.eq.s32.totalorder %s25, 0
      %p83 = por %p81, %p82
      %p84 = scmp.ne.s32.totalorder %s72, %s73
      %p85 = scmp.eq.s32.totalorder %s26, 3
      %p86 = por %p84, %p85
      %p88 = scmp.ne.s32.totalorder %s73, %s87
      %p89 = scmp.eq.s32.totalorder %s26, 0
      %p90 = por %p88, %p89
      %s92 = sadd.s32 %s91, 1
      %p95 = scmp.eq.s32.totalorder %s20, 3
      %p96 = scmp.ne.s32.totalorder %s91, %s93
      %p97 = scmp.eq.s32.totalorder %s20, 0
      %p98 = por %p96, %p97
      %p99 = scmp.ne.s32.totalorder %s91, %s93
      %p100 = scmp.eq.s32.totalorder %s25, 3
      %p101 = por %p99, %p100
      %p102 = scmp.ne.s32.totalorder %s93, %s94
      %p103 = scmp.eq.s32.totalorder %s25, 0
      %p104 = por %p102, %p103
      %p105 = scmp.ne.s32.totalorder %s93, %s94
      %p106 = scmp.eq.s32.totalorder %s26, 3
      %p107 = por %p105, %p106
      %p109 = scmp.ne.s32.totalorder %s94, %s108
      %p110 = scmp.eq.s32.totalorder %s26, 0
      %p111 = por %p109, %p110
      %s113 = sadd.s32 %s112, 1
      %p116 = scmp.eq.s32.totalorder %s20, 3
      %p117 = scmp.ne.s32.totalorder %s112, %s114
      %p118 = scmp.eq.s32.totalorder %s20, 0
      %p119 = por %p117, %p118
      %p120 = scmp.ne.s32.totalorder %s112, %s114
      %p121 = scmp.eq.s32.totalorder %s25, 3
      %p122 = por %p120, %p121
      %p123 = scmp.ne.s32.totalorder %s114, %s115
      %p124 = scmp.eq.s32.totalorder %s25, 0
      %p125 = por %p123, %p124
      %p126 = scmp.ne.s32.totalorder %s114, %s115
      %p127 = scmp.eq.s32.totalorder %s26, 3
      %p128 = por %p126, %p127
      %p130 = scmp.ne.s32.totalorder %s115, %s129
      %p131 = scmp.eq.s32.totalorder %s26, 0
      %p132 = por %p130, %p131
      %s134 = sadd.s32 %s133, 1
      %p137 = scmp.eq.s32.totalorder %s20, 3
      %p138 = scmp.ne.s32.totalorder %s133, %s135
      %p139 = scmp.eq.s32.totalorder %s20, 0
      %p140 = por %p138, %p139
      %p141 = scmp.ne.s32.totalorder %s133, %s135
      %p142 = scmp.eq.s32.totalorder %s25, 3
      %p143 = por %p141, %p142
      %p144 = scmp.ne.s32.totalorder %s135, %s136
      %p145 = scmp.eq.s32.totalorder %s25, 0
      %p146 = por %p144, %p145
      %p147 = scmp.ne.s32.totalorder %s135, %s136
      %p148 = scmp.eq.s32.totalorder %s26, 3
      %p149 = por %p147, %p148
      %p151 = scmp.ne.s32.totalorder %s136, %s150
      %p152 = scmp.eq.s32.totalorder %s26, 0
      %p153 = por %p151, %p152
      %s155 = sadd.s32 %s154, 1
      %p158 = scmp.eq.s32.totalorder %s20, 3
      %p159 = scmp.ne.s32.totalorder %s154, %s156
      %p160 = scmp.eq.s32.totalorder %s20, 0
      %p161 = por %p159, %p160
      %p162 = scmp.ne.s32.totalorder %s154, %s156
      %p163 = scmp.eq.s32.totalorder %s25, 3
      %p164 = por %p162, %p163
      %p165 = scmp.ne.s32.totalorder %s156, %s157
      %p166 = scmp.eq.s32.totalorder %s25, 0
      %p167 = por %p165, %p166
      %p168 = scmp.ne.s32.totalorder %s156, %s157
      %p169 = scmp.eq.s32.totalorder %s26, 3
      %p170 = por %p168, %p169
      %p172 = scmp.ne.s32.totalorder %s157, %s171
      %p173 = scmp.eq.s32.totalorder %s26, 0
      %p174 = por %p172, %p173
      %s176 = sadd.s32 %s175, 1
      %p179 = scmp.eq.s32.totalorder %s20, 3
      %p180 = scmp.ne.s32.totalorder %s175, %s177
      %p181 = scmp.eq.s32.totalorder %s20, 0
      %p182 = por %p180, %p181
      %p183 = scmp.ne.s32.totalorder %s175, %s177
      %p184 = scmp.eq.s32.totalorder %s25, 3
      %p185 = por %p183, %p184
      %p186 = scmp.ne.s32.totalorder %s177, %s178
      %p187 = scmp.eq.s32.totalorder %s25, 0
      %p188 = por %p186, %p187
      %p189 = scmp.ne.s32.totalorder %s177, %s178
      %p190 = scmp.eq.s32.totalorder %s26, 3
      %p191 = por %p189, %p190
      %p193 = scmp.ne.s32.totalorder %s178, %s192
      %p194 = scmp.eq.s32.totalorder %s26, 0
      %p195 = por %p193, %p194
      %s197 = sadd.s32 %s196, 1
      %p200 = scmp.eq.s32.totalorder %s20, 3
      %p201 = scmp.ne.s32.totalorder %s196, %s198
      %p202 = scmp.eq.s32.totalorder %s20, 0
      %p203 = por %p201, %p202
      %p204 = scmp.ne.s32.totalorder %s196, %s198
      %p205 = scmp.eq.s32.totalorder %s25, 3
      %p206 = por %p204, %p205
      %p207 = scmp.ne.s32.totalorder %s198, %s199
      %p208 = scmp.eq.s32.totalorder %s25, 0
      %p209 = por %p207, %p208
      %p210 = scmp.ne.s32.totalorder %s198, %s199
      %p211 = scmp.eq.s32.totalorder %s26, 3
      %p212 = por %p210, %p211
      %p214 = scmp.ne.s32.totalorder %s199, %s213
      %p215 = scmp.eq.s32.totalorder %s26, 0
      %p216 = por %p214, %p215
      %s218 = sadd.s32 %s217, 1
      %p221 = scmp.eq.s32.totalorder %s20, 3
      %p222 = scmp.ne.s32.totalorder %s217, %s219
      %p223 = scmp.eq.s32.totalorder %s20, 0
      %p224 = por %p222, %p223
      %p225 = scmp.ne.s32.totalorder %s217, %s219
      %p226 = scmp.eq.s32.totalorder %s25, 3
      %p227 = por %p225, %p226
      %p228 = scmp.ne.s32.totalorder %s219, %s220
      %p229 = scmp.eq.s32.totalorder %s25, 0
      %p230 = por %p228, %p229
      %p231 = scmp.ne.s32.totalorder %s219, %s220
      %p232 = scmp.eq.s32.totalorder %s26, 3
      %p233 = por %p231, %p232
      %p235 = scmp.ne.s32.totalorder %s220, %s234
      %p236 = scmp.eq.s32.totalorder %s26, 0
      %p237 = por %p235, %p236
      %s239 = sadd.s32 %s238, 1
      %p242 = scmp.eq.s32.totalorder %s20, 3
      %p243 = scmp.ne.s32.totalorder %s238, %s240
      %p244 = scmp.eq.s32.totalorder %s20, 0
      %p245 = por %p243, %p244
      %p246 = scmp.ne.s32.totalorder %s238, %s240
      %p247 = scmp.eq.s32.totalorder %s25, 3
      %p248 = por %p246, %p247
      %p249 = scmp.ne.s32.totalorder %s240, %s241
      %p250 = scmp.eq.s32.totalorder %s25, 0
      %p251 = por %p249, %p250
      %p252 = scmp.ne.s32.totalorder %s240, %s241
      %p253 = scmp.eq.s32.totalorder %s26, 3
      %p254 = por %p252, %p253
      %p256 = scmp.ne.s32.totalorder %s241, %s255
      %p257 = scmp.eq.s32.totalorder %s26, 0
      %p258 = por %p256, %p257
      %s260 = sadd.s32 %s259, 1
      %p263 = scmp.eq.s32.totalorder %s20, 3
      %p264 = scmp.ne.s32.totalorder %s259, %s261
      %p265 = scmp.eq.s32.totalorder %s20, 0
      %p266 = por %p264, %p265
      %p267 = scmp.ne.s32.totalorder %s259, %s261
      %p268 = scmp.eq.s32.totalorder %s25, 3
      %p269 = por %p267, %p268
      %p270 = scmp.ne.s32.totalorder %s261, %s262
      %p271 = scmp.eq.s32.totalorder %s25, 0
      %p272 = por %p270, %p271
      %p273 = scmp.ne.s32.totalorder %s261, %s262
      %p274 = scmp.eq.s32.totalorder %s26, 3
      %p275 = por %p273, %p274
      %p277 = scmp.ne.s32.totalorder %s262, %s276
      %p278 = scmp.eq.s32.totalorder %s26, 0
      %p279 = por %p277, %p278
      %p280 = scmp.le.s32.totalorder 1, %s20
      %p281 = scmp.lt.s32.totalorder %s20, 5
      %p282 = pnand %p280, %p281
      %p283 = pneg %p282
      // Predicated region
      $region9: #{tpu_custom_call.1} parent=5 // pred_check
        _
      $region10: #{tpu_custom_call.1} parent=5 // pred_check_branch
        %285 = sbr.rel (%p282) target = $region12
      $region11: #{tpu_custom_call.1} parent=5 // pred_region
        %s286 = ssub.s32 %s20, 1
        // Predicated region
        $region13: #{tpu_custom_call.1} parent=11 // pred_check
          %p287 = pneg %p41
        $region14: #{tpu_custom_call.1} parent=11 // pred_check_branch
          %289 = sbr.rel (%p287) target = $region16
        $region15: #{tpu_custom_call.1} parent=11 // pred_region
          _
        $region16: #{tpu_custom_call.1} parent=11 // pred_fallthru
          _
        // Predicated region
        $region17: #{tpu_custom_call.1} parent=11 // pred_check
          %p290 = pneg %p62
        $region18: #{tpu_custom_call.1} parent=11 // pred_check_branch
          %292 = sbr.rel (%p290) target = $region20
        $region19: #{tpu_custom_call.1} parent=11 // pred_region
          _
        $region20: #{tpu_custom_call.1} parent=11 // pred_fallthru
          _
        // Predicated region
        $region21: #{tpu_custom_call.1} parent=11 // pred_check
          %p293 = pneg %p83
        $region22: #{tpu_custom_call.1} parent=11 // pred_check_branch
          %295 = sbr.rel (%p293) target = $region24
        $region23: #{tpu_custom_call.1} parent=11 // pred_region
          _
        $region24: #{tpu_custom_call.1} parent=11 // pred_fallthru
          _
        // Predicated region
        $region25: #{tpu_custom_call.1} parent=11 // pred_check
          %p296 = pneg %p104
        $region26: #{tpu_custom_call.1} parent=11 // pred_check_branch
          %298 = sbr.rel (%p296) target = $region28
        $region27: #{tpu_custom_call.1} parent=11 // pred_region
          _
        $region28: #{tpu_custom_call.1} parent=11 // pred_fallthru
          _
        // Predicated region
        $region29: #{tpu_custom_call.1} parent=11 // pred_check
          %p299 = pneg %p125
        $region30: #{tpu_custom_call.1} parent=11 // pred_check_branch
          %301 = sbr.rel (%p299) target = $region32
        $region31: #{tpu_custom_call.1} parent=11 // pred_region
          _
        $region32: #{tpu_custom_call.1} parent=11 // pred_fallthru
          _
        // Predicated region
        $region33: #{tpu_custom_call.1} parent=11 // pred_check
          %p302 = pneg %p146
        $region34: #{tpu_custom_call.1} parent=11 // pred_check_branch
          %304 = sbr.rel (%p302) target = $region36
        $region35: #{tpu_custom_call.1} parent=11 // pred_region
          _
        $region36: #{tpu_custom_call.1} parent=11 // pred_fallthru
          _
        // Predicated region
        $region37: #{tpu_custom_call.1} parent=11 // pred_check
          %p305 = pneg %p167
        $region38: #{tpu_custom_call.1} parent=11 // pred_check_branch
          %307 = sbr.rel (%p305) target = $region40
        $region39: #{tpu_custom_call.1} parent=11 // pred_region
          %s309 = ssub.s32 16, 16
          %310 = vsyncadd [#allocation8], %s309
          %s312 = sshll.u32 %s6, 4
          %s313 = int_to_ptr.vmem [resolvable:$true] %s312
          %315 = dma.vmem_to_smem %s313, 16, [#allocation5], [#allocation8]
        $region40: #{tpu_custom_call.1} parent=11 // pred_fallthru
          _
        // Predicated region
        $region41: #{tpu_custom_call.1} parent=11 // pred_check
          %p316 = pneg %p188
        $region42: #{tpu_custom_call.1} parent=11 // pred_check_branch
          %318 = sbr.rel (%p316) target = $region44
        $region43: #{tpu_custom_call.1} parent=11 // pred_region
          %s320 = ssub.s32 32768, 32768
          %321 = vsyncadd [#allocation6], %s320
          %s322 = sshll.u32 [#allocation9], 4
          %s323 = int_to_ptr.vmem [resolvable:$true] %s322
          %328 = dma.hbm_to_vmem [thread:$0]  %s7, 32768, %s323, [#allocation6], 128, 128, 8
        $region44: #{tpu_custom_call.1} parent=11 // pred_fallthru
          _
        // Predicated region
        $region45: #{tpu_custom_call.1} parent=11 // pred_check
          %p329 = pneg %p209
        $region46: #{tpu_custom_call.1} parent=11 // pred_check_branch
          %331 = sbr.rel (%p329) target = $region48
        $region47: #{tpu_custom_call.1} parent=11 // pred_region
          _
        $region48: #{tpu_custom_call.1} parent=11 // pred_fallthru
          _
        // Predicated region
        $region49: #{tpu_custom_call.1} parent=11 // pred_check
          %p332 = pneg %p230
        $region50: #{tpu_custom_call.1} parent=11 // pred_check_branch
          %334 = sbr.rel (%p332) target = $region52
        $region51: #{tpu_custom_call.1} parent=11 // pred_region
          _
        $region52: #{tpu_custom_call.1} parent=11 // pred_fallthru
          _
        // Predicated region
        $region53: #{tpu_custom_call.1} parent=11 // pred_check
          %p335 = pneg %p251
        $region54: #{tpu_custom_call.1} parent=11 // pred_check_branch
          %337 = sbr.rel (%p335) target = $region56
        $region55: #{tpu_custom_call.1} parent=11 // pred_region
          _
        $region56: #{tpu_custom_call.1} parent=11 // pred_fallthru
          _
      $region12: #{tpu_custom_call.1} parent=5 // pred_fallthru
        _
      %p338 = scmp.lt.s32.totalorder %s20, 4
      // Predicated region
      $region57: #{tpu_custom_call.1} parent=5 // pred_check
        %p339 = pneg %p338
      $region58: #{tpu_custom_call.1} parent=5 // pred_check_branch
        %341 = sbr.rel (%p339) target = $region60
      $region59: #{tpu_custom_call.1} parent=5 // pred_region
        _
      $region60: #{tpu_custom_call.1} parent=5 // pred_fallthru
        _
      %p342 = scmp.le.s32.totalorder 1, %s20
      %p343 = scmp.lt.s32.totalorder %s20, 5
      %p344 = pnand %p342, %p343
      %p345 = pneg %p344
      // Predicated region
      $region61: #{tpu_custom_call.1} parent=5 // pred_check
        _
      $region62: #{tpu_custom_call.1} parent=5 // pred_check_branch
        %347 = sbr.rel (%p344) target = $region64
      $region63: #{tpu_custom_call.1} parent=5 // pred_region
        %s348 = ssub.s32 %s20, 1
        // Predicated region
        $region65: #{tpu_custom_call.1} parent=63 // pred_check
          %p349 = pneg %p167
        $region66: #{tpu_custom_call.1} parent=63 // pred_check_branch
          %351 = sbr.rel (%p349) target = $region68
        $region67: #{tpu_custom_call.1} parent=63 // pred_region
          %352 = dma.done [#allocation8], 16
        $region68: #{tpu_custom_call.1} parent=63 // pred_fallthru
          _
        // Predicated region
        $region69: #{tpu_custom_call.1} parent=63 // pred_check
          %p353 = pneg %p188
        $region70: #{tpu_custom_call.1} parent=63 // pred_check_branch
          %355 = sbr.rel (%p353) target = $region72
        $region71: #{tpu_custom_call.1} parent=63 // pred_region
          %356 = dma.done [#allocation6], 32768
        $region72: #{tpu_custom_call.1} parent=63 // pred_fallthru
          _
        %357 = sfence
        %p358 = pneg %p41
        %p359 = pneg %p38
        %p360 = pneg %p62
        %p361 = pneg %p59
        %p362 = pneg %p83
        %p363 = pneg %p80
        %p364 = pneg %p104
        %p365 = pneg %p101
        %p366 = pneg %p125
        %p367 = pneg %p122
        %p368 = pneg %p146
        %p369 = pneg %p143
        %p370 = pneg %p167
        %p371 = pneg %p164
        %p372 = pneg %p188
        %p373 = pneg %p185
        %p374 = pneg %p209
        %p375 = pneg %p206
        %p376 = pneg %p230
        %p377 = pneg %p227
        %p378 = pneg %p251
        %p379 = pneg %p248
        %p380 = pneg %p272
        %p381 = pneg %p269
        %p382 = scmp.eq.s32.totalorder %s25, 0
        // Predicated region
        $region73: #{tpu_custom_call.1} parent=63 // pred_check
          %p383 = pneg %p382
        $region74: #{tpu_custom_call.1} parent=63 // pred_check_branch
          %385 = sbr.rel (%p383) target = $region76
        $region75: #{tpu_custom_call.1} parent=63 // pred_region
          %386 = vst [vmem:[#allocation2] sm:$0xff] 0.0
          %387 = vst [vmem:[#allocation2 + $0x8] sm:$0xff] 0.0
          %388 = vst [vmem:[#allocation2 + $0x10] sm:$0xff] 0.0
          %389 = vst [vmem:[#allocation2 + $0x18] sm:$0xff] 0.0
          %390 = vst [vmem:[#allocation2 + $0x20] sm:$0xff] 0.0
          %391 = vst [vmem:[#allocation2 + $0x28] sm:$0xff] 0.0
          %392 = vst [vmem:[#allocation2 + $0x30] sm:$0xff] 0.0
          %393 = vst [vmem:[#allocation2 + $0x38] sm:$0xff] 0.0
          %v394 = vld [vmem:[%s1] sm:$0xff]
          %v395 = vld [vmem:[%s0] sm:$0xff]
          %v396 = vld [vmem:[%s0 + $0x8] sm:$0xff]
          %v397 = vld [vmem:[%s0 + $0x10] sm:$0xff]
          %v398 = vld [vmem:[%s0 + $0x18] sm:$0xff]
          %v399 = vld [vmem:[%s3] sm:$0xff]
          %401 = vset.pattern.permute.xlu0 0
          %402 = vperm.xlu0 %401, %v399
          %v403 = vpop.permute.xlu0 %402
          %v409 = vcombine.high %v395, %v395
          %v410 = vcombine.high %v396, %v396
          %v411 = vcombine.high %v397, %v397
          %v412 = vcombine.high %v398, %v398
          %vm413 = vcmask 31744
          %v415 = vsel %vm413, %v394, 0
          %vm417 = vcmask 1043456
          %v418 = vsel %vm417, %v395, 0
          %v420 = vsel %vm417, %v409, 0
          %v422 = vsel %vm417, %v396, 0
          %v424 = vsel %vm417, %v410, 0
          %v426 = vsel %vm417, %v397, 0
          %v428 = vsel %vm417, %v411, 0
          %v430 = vsel %vm417, %v398, 0
          %v432 = vsel %vm417, %v412, 0
          %434 = vmatprep.subr.mxu0 0.0
          %435 = vmatpush1.msra.mxu0 0.0
          %436 = vmatprep.subr.mxu0 0.0
          %437 = vmatpush1.msra.mxu0 0.0
          %438 = vmatprep.subr.mxu0 0.0
          %439 = vmatpush1.msra.mxu0 0.0
          %440 = vmatprep.subr.mxu0 0.0
          %441 = vmatpush1.msra.mxu0 0.0
          %442 = vmatprep.subr.mxu0 0.0
          %443 = vmatpush1.msra.mxu0 0.0
          %444 = vmatprep.subr.mxu0 0.0
          %445 = vmatpush1.msra.mxu0 0.0
          %446 = vmatprep.subr.mxu0 0.0
          %447 = vmatpush1.msra.mxu0 0.0
          %448 = vmatprep.subr.mxu0 0.0
          %449 = vmatpush1.msra.mxu0 0.0
          %450 = vmatprep.subr.mxu0 0.0
          %451 = vmatpush1.msra.mxu0 0.0
          %452 = vmatprep.subr.mxu0 0.0
          %453 = vmatpush1.msra.mxu0 0.0
          %454 = vmatprep.subr.mxu0 0.0
          %455 = vmatpush1.msra.mxu0 0.0
          %456 = vmatprep.subr.mxu0 0.0
          %457 = vmatpush1.msra.mxu0 0.0
          %458 = vmatprep.subr.mxu0 0.0
          %459 = vmatpush1.msra.mxu0 0.0
          %460 = vmatprep.subr.mxu0 0.0
          %461 = vmatpush1.msra.mxu0 0.0
          %462 = vmatprep.subr.mxu0 0.0
          %463 = vmatpush1.msra.mxu0 0.0
          %464 = vmatprep.subr.mxu0 %v420
          %465 = vmatpush1.msra.mxu0 %v418
          %466 = vmatprep.subr.mxu0 0.0
          %467 = vmatpush2.msra.mxu0 0.0
          %468 = vmatprep.subr.mxu0 0.0
          %469 = vmatpush2.msra.mxu0 0.0
          %470 = vmatprep.subr.mxu0 0.0
          %471 = vmatpush2.msra.mxu0 0.0
          %472 = vmatprep.subr.mxu0 0.0
          %473 = vmatpush2.msra.mxu0 0.0
          %474 = vmatprep.subr.mxu0 0.0
          %475 = vmatpush2.msra.mxu0 0.0
          %476 = vmatprep.subr.mxu0 0.0
          %477 = vmatpush2.msra.mxu0 0.0
          %478 = vmatprep.subr.mxu0 0.0
          %479 = vmatpush2.msra.mxu0 0.0
          %480 = vmatprep.subr.mxu0 0.0
          %481 = vmatpush2.msra.mxu0 0.0
          %482 = vmatprep.subr.mxu0 0.0
          %483 = vmatpush2.msra.mxu0 0.0
          %484 = vmatprep.subr.mxu0 0.0
          %485 = vmatpush2.msra.mxu0 0.0
          %486 = vmatprep.subr.mxu0 0.0
          %487 = vmatpush2.msra.mxu0 0.0
          %488 = vmatprep.subr.mxu0 0.0
          %489 = vmatpush2.msra.mxu0 0.0
          %490 = vmatprep.subr.mxu0 0.0
          %491 = vmatpush2.msra.mxu0 0.0
          %492 = vmatprep.subr.mxu0 0.0
          %493 = vmatpush2.msra.mxu0 0.0
          %494 = vmatprep.subr.mxu0 0.0
          %495 = vmatpush2.msra.mxu0 0.0
          %496 = vmatprep.subr.mxu0 0.0
          %497 = vmatpush2.msra.mxu0 0.0
          %498 = vmatprep.mubr.f32.mxu0 0.0
          %499 = vmatmul.mubr.f32.gmra.mxu0 %v415
          %v500 = vpop.f32.mrf.mxu0
          %v501 = vadd.f32 %v403, %v500
          %v502 = vpop.f32.mrf.mxu0
          %v503 = vadd.f32 %v403, %v502
          %504 = vdwg.mxu0
          %505 = vmatprep.subr.mxu0 0.0
          %506 = vmatpush1.msra.mxu0 0.0
          %507 = vmatprep.subr.mxu0 0.0
          %508 = vmatpush1.msra.mxu0 0.0
          %509 = vmatprep.subr.mxu0 0.0
          %510 = vmatpush1.msra.mxu0 0.0
          %511 = vmatprep.subr.mxu0 0.0
          %512 = vmatpush1.msra.mxu0 0.0
          %513 = vmatprep.subr.mxu0 0.0
          %514 = vmatpush1.msra.mxu0 0.0
          %515 = vmatprep.subr.mxu0 0.0
          %516 = vmatpush1.msra.mxu0 0.0
          %517 = vmatprep.subr.mxu0 0.0
          %518 = vmatpush1.msra.mxu0 0.0
          %519 = vmatprep.subr.mxu0 0.0
          %520 = vmatpush1.msra.mxu0 0.0
          %521 = vmatprep.subr.mxu0 0.0
          %522 = vmatpush1.msra.mxu0 0.0
          %523 = vmatprep.subr.mxu0 0.0
          %524 = vmatpush1.msra.mxu0 0.0
          %525 = vmatprep.subr.mxu0 0.0
          %526 = vmatpush1.msra.mxu0 0.0
          %527 = vmatprep.subr.mxu0 0.0
          %528 = vmatpush1.msra.mxu0 0.0
          %529 = vmatprep.subr.mxu0 0.0
          %530 = vmatpush1.msra.mxu0 0.0
          %531 = vmatprep.subr.mxu0 0.0
          %532 = vmatpush1.msra.mxu0 0.0
          %533 = vmatprep.subr.mxu0 0.0
          %534 = vmatpush1.msra.mxu0 0.0
          %535 = vmatprep.subr.mxu0 %v424
          %536 = vmatpush1.msra.mxu0 %v422
          %537 = vmatprep.subr.mxu0 0.0
          %538 = vmatpush2.msra.mxu0 0.0
          %539 = vmatprep.subr.mxu0 0.0
          %540 = vmatpush2.msra.mxu0 0.0
          %541 = vmatprep.subr.mxu0 0.0
          %542 = vmatpush2.msra.mxu0 0.0
          %543 = vmatprep.subr.mxu0 0.0
          %544 = vmatpush2.msra.mxu0 0.0
          %545 = vmatprep.subr.mxu0 0.0
          %546 = vmatpush2.msra.mxu0 0.0
          %547 = vmatprep.subr.mxu0 0.0
          %548 = vmatpush2.msra.mxu0 0.0
          %549 = vmatprep.subr.mxu0 0.0
          %550 = vmatpush2.msra.mxu0 0.0
          %551 = vmatprep.subr.mxu0 0.0
          %552 = vmatpush2.msra.mxu0 0.0
          %553 = vmatprep.subr.mxu0 0.0
          %554 = vmatpush2.msra.mxu0 0.0
          %555 = vmatprep.subr.mxu0 0.0
          %556 = vmatpush2.msra.mxu0 0.0
          %557 = vmatprep.subr.mxu0 0.0
          %558 = vmatpush2.msra.mxu0 0.0
          %559 = vmatprep.subr.mxu0 0.0
          %560 = vmatpush2.msra.mxu0 0.0
          %561 = vmatprep.subr.mxu0 0.0
          %562 = vmatpush2.msra.mxu0 0.0
          %563 = vmatprep.subr.mxu0 0.0
          %564 = vmatpush2.msra.mxu0 0.0
          %565 = vmatprep.subr.mxu0 0.0
          %566 = vmatpush2.msra.mxu0 0.0
          %567 = vmatprep.subr.mxu0 0.0
          %568 = vmatpush2.msra.mxu0 0.0
          %569 = vmatprep.mubr.f32.mxu0 0.0
          %570 = vmatmul.mubr.f32.gmra.mxu0 %v415
          %v571 = vpop.f32.mrf.mxu0
          %v572 = vadd.f32 %v403, %v571
          %v573 = vpop.f32.mrf.mxu0
          %v574 = vadd.f32 %v403, %v573
          %575 = vdwg.mxu0
          %576 = vmatprep.subr.mxu0 0.0
          %577 = vmatpush1.msra.mxu0 0.0
          %578 = vmatprep.subr.mxu0 0.0
          %579 = vmatpush1.msra.mxu0 0.0
          %580 = vmatprep.subr.mxu0 0.0
          %581 = vmatpush1.msra.mxu0 0.0
          %582 = vmatprep.subr.mxu0 0.0
          %583 = vmatpush1.msra.mxu0 0.0
          %584 = vmatprep.subr.mxu0 0.0
          %585 = vmatpush1.msra.mxu0 0.0
          %586 = vmatprep.subr.mxu0 0.0
          %587 = vmatpush1.msra.mxu0 0.0
          %588 = vmatprep.subr.mxu0 0.0
          %589 = vmatpush1.msra.mxu0 0.0
          %590 = vmatprep.subr.mxu0 0.0
          %591 = vmatpush1.msra.mxu0 0.0
          %592 = vmatprep.subr.mxu0 0.0
          %593 = vmatpush1.msra.mxu0 0.0
          %594 = vmatprep.subr.mxu0 0.0
          %595 = vmatpush1.msra.mxu0 0.0
          %596 = vmatprep.subr.mxu0 0.0
          %597 = vmatpush1.msra.mxu0 0.0
          %598 = vmatprep.subr.mxu0 0.0
          %599 = vmatpush1.msra.mxu0 0.0
          %600 = vmatprep.subr.mxu0 0.0
          %601 = vmatpush1.msra.mxu0 0.0
          %602 = vmatprep.subr.mxu0 0.0
          %603 = vmatpush1.msra.mxu0 0.0
          %604 = vmatprep.subr.mxu0 0.0
          %605 = vmatpush1.msra.mxu0 0.0
          %606 = vmatprep.subr.mxu0 %v428
          %607 = vmatpush1.msra.mxu0 %v426
          %608 = vmatprep.subr.mxu0 0.0
          %609 = vmatpush2.msra.mxu0 0.0
          %610 = vmatprep.subr.mxu0 0.0
          %611 = vmatpush2.msra.mxu0 0.0
          %612 = vmatprep.subr.mxu0 0.0
          %613 = vmatpush2.msra.mxu0 0.0
          %614 = vmatprep.subr.mxu0 0.0
          %615 = vmatpush2.msra.mxu0 0.0
          %616 = vmatprep.subr.mxu0 0.0
          %617 = vmatpush2.msra.mxu0 0.0
          %618 = vmatprep.subr.mxu0 0.0
          %619 = vmatpush2.msra.mxu0 0.0
          %620 = vmatprep.subr.mxu0 0.0
          %621 = vmatpush2.msra.mxu0 0.0
          %622 = vmatprep.subr.mxu0 0.0
          %623 = vmatpush2.msra.mxu0 0.0
          %624 = vmatprep.subr.mxu0 0.0
          %625 = vmatpush2.msra.mxu0 0.0
          %626 = vmatprep.subr.mxu0 0.0
          %627 = vmatpush2.msra.mxu0 0.0
          %628 = vmatprep.subr.mxu0 0.0
          %629 = vmatpush2.msra.mxu0 0.0
          %630 = vmatprep.subr.mxu0 0.0
          %631 = vmatpush2.msra.mxu0 0.0
          %632 = vmatprep.subr.mxu0 0.0
          %633 = vmatpush2.msra.mxu0 0.0
          %634 = vmatprep.subr.mxu0 0.0
          %635 = vmatpush2.msra.mxu0 0.0
          %636 = vmatprep.subr.mxu0 0.0
          %637 = vmatpush2.msra.mxu0 0.0
          %638 = vmatprep.subr.mxu0 0.0
          %639 = vmatpush2.msra.mxu0 0.0
          %640 = vmatprep.mubr.f32.mxu0 0.0
          %641 = vmatmul.mubr.f32.gmra.mxu0 %v415
          %v642 = vpop.f32.mrf.mxu0
          %v643 = vadd.f32 %v403, %v642
          %v644 = vpop.f32.mrf.mxu0
          %v645 = vadd.f32 %v403, %v644
          %646 = vdwg.mxu0
          %647 = vmatprep.subr.mxu0 0.0
          %648 = vmatpush1.msra.mxu0 0.0
          %649 = vmatprep.subr.mxu0 0.0
          %650 = vmatpush1.msra.mxu0 0.0
          %651 = vmatprep.subr.mxu0 0.0
          %652 = vmatpush1.msra.mxu0 0.0
          %653 = vmatprep.subr.mxu0 0.0
          %654 = vmatpush1.msra.mxu0 0.0
          %655 = vmatprep.subr.mxu0 0.0
          %656 = vmatpush1.msra.mxu0 0.0
          %657 = vmatprep.subr.mxu0 0.0
          %658 = vmatpush1.msra.mxu0 0.0
          %659 = vmatprep.subr.mxu0 0.0
          %660 = vmatpush1.msra.mxu0 0.0
          %661 = vmatprep.subr.mxu0 0.0
          %662 = vmatpush1.msra.mxu0 0.0
          %663 = vmatprep.subr.mxu0 0.0
          %664 = vmatpush1.msra.mxu0 0.0
          %665 = vmatprep.subr.mxu0 0.0
          %666 = vmatpush1.msra.mxu0 0.0
          %667 = vmatprep.subr.mxu0 0.0
          %668 = vmatpush1.msra.mxu0 0.0
          %669 = vmatprep.subr.mxu0 0.0
          %670 = vmatpush1.msra.mxu0 0.0
          %671 = vmatprep.subr.mxu0 0.0
          %672 = vmatpush1.msra.mxu0 0.0
          %673 = vmatprep.subr.mxu0 0.0
          %674 = vmatpush1.msra.mxu0 0.0
          %675 = vmatprep.subr.mxu0 0.0
          %676 = vmatpush1.msra.mxu0 0.0
          %677 = vmatprep.subr.mxu0 %v432
          %678 = vmatpush1.msra.mxu0 %v430
          %679 = vmatprep.subr.mxu0 0.0
          %680 = vmatpush2.msra.mxu0 0.0
          %681 = vmatprep.subr.mxu0 0.0
          %682 = vmatpush2.msra.mxu0 0.0
          %683 = vmatprep.subr.mxu0 0.0
          %684 = vmatpush2.msra.mxu0 0.0
          %685 = vmatprep.subr.mxu0 0.0
          %686 = vmatpush2.msra.mxu0 0.0
          %687 = vmatprep.subr.mxu0 0.0
          %688 = vmatpush2.msra.mxu0 0.0
          %689 = vmatprep.subr.mxu0 0.0
          %690 = vmatpush2.msra.mxu0 0.0
          %691 = vmatprep.subr.mxu0 0.0
          %692 = vmatpush2.msra.mxu0 0.0
          %693 = vmatprep.subr.mxu0 0.0
          %694 = vmatpush2.msra.mxu0 0.0
          %695 = vmatprep.subr.mxu0 0.0
          %696 = vmatpush2.msra.mxu0 0.0
          %697 = vmatprep.subr.mxu0 0.0
          %698 = vmatpush2.msra.mxu0 0.0
          %699 = vmatprep.subr.mxu0 0.0
          %700 = vmatpush2.msra.mxu0 0.0
          %701 = vmatprep.subr.mxu0 0.0
          %702 = vmatpush2.msra.mxu0 0.0
          %703 = vmatprep.subr.mxu0 0.0
          %704 = vmatpush2.msra.mxu0 0.0
          %705 = vmatprep.subr.mxu0 0.0
          %706 = vmatpush2.msra.mxu0 0.0
          %707 = vmatprep.subr.mxu0 0.0
          %708 = vmatpush2.msra.mxu0 0.0
          %709 = vmatprep.subr.mxu0 0.0
          %710 = vmatpush2.msra.mxu0 0.0
          %711 = vmatprep.mubr.f32.mxu0 0.0
          %712 = vmatmul.mubr.f32.gmra.mxu0 %v415
          %v713 = vpop.f32.mrf.mxu0
          %v714 = vadd.f32 %v403, %v713
          %v715 = vpop.f32.mrf.mxu0
          %v716 = vadd.f32 %v403, %v715
          %717 = vdwg.mxu0
          %718 = vst [vmem:[#allocation3] sm:$0xff] %v501
          %719 = vst [vmem:[#allocation3 + $0x8] sm:$0xff] %v503
          %720 = vst [vmem:[#allocation3 + $0x10] sm:$0xff] %v572
          %721 = vst [vmem:[#allocation3 + $0x18] sm:$0xff] %v574
          %722 = vst [vmem:[#allocation3 + $0x20] sm:$0xff] %v643
          %723 = vst [vmem:[#allocation3 + $0x28] sm:$0xff] %v645
          %724 = vst [vmem:[#allocation3 + $0x30] sm:$0xff] %v714
          %725 = vst [vmem:[#allocation3 + $0x38] sm:$0xff] %v716
        $region76: #{tpu_custom_call.1} parent=63 // pred_fallthru
          _
        %v726 = vld [vmem:[#allocation3] sm:$0xff]
        %v727 = vld [vmem:[#allocation3 + $0x8] sm:$0xff]
        %v728 = vld [vmem:[#allocation3 + $0x10] sm:$0xff]
        %v729 = vld [vmem:[#allocation3 + $0x18] sm:$0xff]
        %v730 = vld [vmem:[#allocation3 + $0x20] sm:$0xff]
        %v731 = vld [vmem:[#allocation3 + $0x28] sm:$0xff]
        %v732 = vld [vmem:[#allocation3 + $0x30] sm:$0xff]
        %v733 = vld [vmem:[#allocation3 + $0x38] sm:$0xff]
        %v734 = vld [vmem:[%s2] sm:$0xff]
        %v735 = vld [vmem:[#allocation2] sm:$0xff]
        %v736 = vld [vmem:[#allocation2 + $0x8] sm:$0xff]
        %v737 = vld [vmem:[#allocation2 + $0x10] sm:$0xff]
        %v738 = vld [vmem:[#allocation2 + $0x18] sm:$0xff]
        %v739 = vld [vmem:[#allocation2 + $0x20] sm:$0xff]
        %v740 = vld [vmem:[#allocation2 + $0x28] sm:$0xff]
        %v741 = vld [vmem:[#allocation2 + $0x30] sm:$0xff]
        %v742 = vld [vmem:[#allocation2 + $0x38] sm:$0xff]
        %vm743 = vcmask 64512
        %v745 = vsel %vm743, %v734, 0
        %747 = vmatprep.subr.mxu0 0.0
        %748 = vmatpush1.msra.mxu0 0.0
        %749 = vmatprep.subr.mxu0 0.0
        %750 = vmatpush1.msra.mxu0 0.0
        %751 = vmatprep.subr.mxu0 0.0
        %752 = vmatpush1.msra.mxu0 0.0
        %753 = vmatprep.subr.mxu0 0.0
        %754 = vmatpush1.msra.mxu0 0.0
        %755 = vmatprep.subr.mxu0 0.0
        %756 = vmatpush1.msra.mxu0 0.0
        %757 = vmatprep.subr.mxu0 0.0
        %758 = vmatpush1.msra.mxu0 0.0
        %759 = vmatprep.subr.mxu0 0.0
        %760 = vmatpush1.msra.mxu0 0.0
        %761 = vmatprep.subr.mxu0 0.0
        %762 = vmatpush1.msra.mxu0 0.0
        %763 = vmatprep.subr.mxu0 0.0
        %764 = vmatpush1.msra.mxu0 0.0
        %765 = vmatprep.subr.mxu0 0.0
        %766 = vmatpush1.msra.mxu0 0.0
        %767 = vmatprep.subr.mxu0 0.0
        %768 = vmatpush1.msra.mxu0 0.0
        %769 = vmatprep.subr.mxu0 0.0
        %770 = vmatpush1.msra.mxu0 0.0
        %771 = vmatprep.subr.mxu0 0.0
        %772 = vmatpush1.msra.mxu0 0.0
        %773 = vmatprep.subr.mxu0 0.0
        %774 = vmatpush1.msra.mxu0 0.0
        %775 = vmatprep.subr.mxu0 0.0
        %776 = vmatpush1.msra.mxu0 0.0
        %777 = vmatprep.subr.mxu0 %v736
        %778 = vmatpush1.msra.mxu0 %v735
        %779 = vmatprep.subr.mxu0 0.0
        %780 = vmatpush2.msra.mxu0 0.0
        %781 = vmatprep.subr.mxu0 0.0
        %782 = vmatpush2.msra.mxu0 0.0
        %783 = vmatprep.subr.mxu0 0.0
        %784 = vmatpush2.msra.mxu0 0.0
        %785 = vmatprep.subr.mxu0 0.0
        %786 = vmatpush2.msra.mxu0 0.0
        %787 = vmatprep.subr.mxu0 0.0
        %788 = vmatpush2.msra.mxu0 0.0
        %789 = vmatprep.subr.mxu0 0.0
        %790 = vmatpush2.msra.mxu0 0.0
        %791 = vmatprep.subr.mxu0 0.0
        %792 = vmatpush2.msra.mxu0 0.0
        %793 = vmatprep.subr.mxu0 0.0
        %794 = vmatpush2.msra.mxu0 0.0
        %795 = vmatprep.subr.mxu0 0.0
        %796 = vmatpush2.msra.mxu0 0.0
        %797 = vmatprep.subr.mxu0 0.0
        %798 = vmatpush2.msra.mxu0 0.0
        %799 = vmatprep.subr.mxu0 0.0
        %800 = vmatpush2.msra.mxu0 0.0
        %801 = vmatprep.subr.mxu0 0.0
        %802 = vmatpush2.msra.mxu0 0.0
        %803 = vmatprep.subr.mxu0 0.0
        %804 = vmatpush2.msra.mxu0 0.0
        %805 = vmatprep.subr.mxu0 0.0
        %806 = vmatpush2.msra.mxu0 0.0
        %807 = vmatprep.subr.mxu0 0.0
        %808 = vmatpush2.msra.mxu0 0.0
        %809 = vmatprep.subr.mxu0 0.0
        %810 = vmatpush2.msra.mxu0 0.0
        %811 = vmatprep.mubr.f32.mxu0 0.0
        %812 = vmatmul.mubr.f32.gmra.mxu0 %v745
        %v813 = vpop.f32.mrf.mxu0
        %v814 = vadd.f32 0.0, %v813
        %v815 = vpop.f32.mrf.mxu0
        %v816 = vadd.f32 0.0, %v815
        %817 = vdwg.mxu0
        %818 = vmatprep.subr.mxu0 0.0
        %819 = vmatpush1.msra.mxu0 0.0
        %820 = vmatprep.subr.mxu0 0.0
        %821 = vmatpush1.msra.mxu0 0.0
        %822 = vmatprep.subr.mxu0 0.0
        %823 = vmatpush1.msra.mxu0 0.0
        %824 = vmatprep.subr.mxu0 0.0
        %825 = vmatpush1.msra.mxu0 0.0
        %826 = vmatprep.subr.mxu0 0.0
        %827 = vmatpush1.msra.mxu0 0.0
        %828 = vmatprep.subr.mxu0 0.0
        %829 = vmatpush1.msra.mxu0 0.0
        %830 = vmatprep.subr.mxu0 0.0
        %831 = vmatpush1.msra.mxu0 0.0
        %832 = vmatprep.subr.mxu0 0.0
        %833 = vmatpush1.msra.mxu0 0.0
        %834 = vmatprep.subr.mxu0 0.0
        %835 = vmatpush1.msra.mxu0 0.0
        %836 = vmatprep.subr.mxu0 0.0
        %837 = vmatpush1.msra.mxu0 0.0
        %838 = vmatprep.subr.mxu0 0.0
        %839 = vmatpush1.msra.mxu0 0.0
        %840 = vmatprep.subr.mxu0 0.0
        %841 = vmatpush1.msra.mxu0 0.0
        %842 = vmatprep.subr.mxu0 0.0
        %843 = vmatpush1.msra.mxu0 0.0
        %844 = vmatprep.subr.mxu0 0.0
        %845 = vmatpush1.msra.mxu0 0.0
        %846 = vmatprep.subr.mxu0 0.0
        %847 = vmatpush1.msra.mxu0 0.0
        %848 = vmatprep.subr.mxu0 %v738
        %849 = vmatpush1.msra.mxu0 %v737
        %850 = vmatprep.subr.mxu0 0.0
        %851 = vmatpush2.msra.mxu0 0.0
        %852 = vmatprep.subr.mxu0 0.0
        %853 = vmatpush2.msra.mxu0 0.0
        %854 = vmatprep.subr.mxu0 0.0
        %855 = vmatpush2.msra.mxu0 0.0
        %856 = vmatprep.subr.mxu0 0.0
        %857 = vmatpush2.msra.mxu0 0.0
        %858 = vmatprep.subr.mxu0 0.0
        %859 = vmatpush2.msra.mxu0 0.0
        %860 = vmatprep.subr.mxu0 0.0
        %861 = vmatpush2.msra.mxu0 0.0
        %862 = vmatprep.subr.mxu0 0.0
        %863 = vmatpush2.msra.mxu0 0.0
        %864 = vmatprep.subr.mxu0 0.0
        %865 = vmatpush2.msra.mxu0 0.0
        %866 = vmatprep.subr.mxu0 0.0
        %867 = vmatpush2.msra.mxu0 0.0
        %868 = vmatprep.subr.mxu0 0.0
        %869 = vmatpush2.msra.mxu0 0.0
        %870 = vmatprep.subr.mxu0 0.0
        %871 = vmatpush2.msra.mxu0 0.0
        %872 = vmatprep.subr.mxu0 0.0
        %873 = vmatpush2.msra.mxu0 0.0
        %874 = vmatprep.subr.mxu0 0.0
        %875 = vmatpush2.msra.mxu0 0.0
        %876 = vmatprep.subr.mxu0 0.0
        %877 = vmatpush2.msra.mxu0 0.0
        %878 = vmatprep.subr.mxu0 0.0
        %879 = vmatpush2.msra.mxu0 0.0
        %880 = vmatprep.subr.mxu0 0.0
        %881 = vmatpush2.msra.mxu0 0.0
        %882 = vmatprep.mubr.f32.mxu0 0.0
        %883 = vmatmul.mubr.f32.gmra.mxu0 %v745
        %v884 = vpop.f32.mrf.mxu0
        %v885 = vadd.f32 0.0, %v884
        %v886 = vpop.f32.mrf.mxu0
        %v887 = vadd.f32 0.0, %v886
        %888 = vdwg.mxu0
        %889 = vmatprep.subr.mxu0 0.0
        %890 = vmatpush1.msra.mxu0 0.0
        %891 = vmatprep.subr.mxu0 0.0
        %892 = vmatpush1.msra.mxu0 0.0
        %893 = vmatprep.subr.mxu0 0.0
        %894 = vmatpush1.msra.mxu0 0.0
        %895 = vmatprep.subr.mxu0 0.0
        %896 = vmatpush1.msra.mxu0 0.0
        %897 = vmatprep.subr.mxu0 0.0
        %898 = vmatpush1.msra.mxu0 0.0
        %899 = vmatprep.subr.mxu0 0.0
        %900 = vmatpush1.msra.mxu0 0.0
        %901 = vmatprep.subr.mxu0 0.0
        %902 = vmatpush1.msra.mxu0 0.0
        %903 = vmatprep.subr.mxu0 0.0
        %904 = vmatpush1.msra.mxu0 0.0
        %905 = vmatprep.subr.mxu0 0.0
        %906 = vmatpush1.msra.mxu0 0.0
        %907 = vmatprep.subr.mxu0 0.0
        %908 = vmatpush1.msra.mxu0 0.0
        %909 = vmatprep.subr.mxu0 0.0
        %910 = vmatpush1.msra.mxu0 0.0
        %911 = vmatprep.subr.mxu0 0.0
        %912 = vmatpush1.msra.mxu0 0.0
        %913 = vmatprep.subr.mxu0 0.0
        %914 = vmatpush1.msra.mxu0 0.0
        %915 = vmatprep.subr.mxu0 0.0
        %916 = vmatpush1.msra.mxu0 0.0
        %917 = vmatprep.subr.mxu0 0.0
        %918 = vmatpush1.msra.mxu0 0.0
        %919 = vmatprep.subr.mxu0 %v740
        %920 = vmatpush1.msra.mxu0 %v739
        %921 = vmatprep.subr.mxu0 0.0
        %922 = vmatpush2.msra.mxu0 0.0
        %923 = vmatprep.subr.mxu0 0.0
        %924 = vmatpush2.msra.mxu0 0.0
        %925 = vmatprep.subr.mxu0 0.0
        %926 = vmatpush2.msra.mxu0 0.0
        %927 = vmatprep.subr.mxu0 0.0
        %928 = vmatpush2.msra.mxu0 0.0
        %929 = vmatprep.subr.mxu0 0.0
        %930 = vmatpush2.msra.mxu0 0.0
        %931 = vmatprep.subr.mxu0 0.0
        %932 = vmatpush2.msra.mxu0 0.0
        %933 = vmatprep.subr.mxu0 0.0
        %934 = vmatpush2.msra.mxu0 0.0
        %935 = vmatprep.subr.mxu0 0.0
        %936 = vmatpush2.msra.mxu0 0.0
        %937 = vmatprep.subr.mxu0 0.0
        %938 = vmatpush2.msra.mxu0 0.0
        %939 = vmatprep.subr.mxu0 0.0
        %940 = vmatpush2.msra.mxu0 0.0
        %941 = vmatprep.subr.mxu0 0.0
        %942 = vmatpush2.msra.mxu0 0.0
        %943 = vmatprep.subr.mxu0 0.0
        %944 = vmatpush2.msra.mxu0 0.0
        %945 = vmatprep.subr.mxu0 0.0
        %946 = vmatpush2.msra.mxu0 0.0
        %947 = vmatprep.subr.mxu0 0.0
        %948 = vmatpush2.msra.mxu0 0.0
        %949 = vmatprep.subr.mxu0 0.0
        %950 = vmatpush2.msra.mxu0 0.0
        %951 = vmatprep.subr.mxu0 0.0
        %952 = vmatpush2.msra.mxu0 0.0
        %953 = vmatprep.mubr.f32.mxu0 0.0
        %954 = vmatmul.mubr.f32.gmra.mxu0 %v745
        %v955 = vpop.f32.mrf.mxu0
        %v956 = vadd.f32 0.0, %v955
        %v957 = vpop.f32.mrf.mxu0
        %v958 = vadd.f32 0.0, %v957
        %959 = vdwg.mxu0
        %960 = vmatprep.subr.mxu0 0.0
        %961 = vmatpush1.msra.mxu0 0.0
        %962 = vmatprep.subr.mxu0 0.0
        %963 = vmatpush1.msra.mxu0 0.0
        %964 = vmatprep.subr.mxu0 0.0
        %965 = vmatpush1.msra.mxu0 0.0
        %966 = vmatprep.subr.mxu0 0.0
        %967 = vmatpush1.msra.mxu0 0.0
        %968 = vmatprep.subr.mxu0 0.0
        %969 = vmatpush1.msra.mxu0 0.0
        %970 = vmatprep.subr.mxu0 0.0
        %971 = vmatpush1.msra.mxu0 0.0
        %972 = vmatprep.subr.mxu0 0.0
        %973 = vmatpush1.msra.mxu0 0.0
        %974 = vmatprep.subr.mxu0 0.0
        %975 = vmatpush1.msra.mxu0 0.0
        %976 = vmatprep.subr.mxu0 0.0
        %977 = vmatpush1.msra.mxu0 0.0
        %978 = vmatprep.subr.mxu0 0.0
        %979 = vmatpush1.msra.mxu0 0.0
        %980 = vmatprep.subr.mxu0 0.0
        %981 = vmatpush1.msra.mxu0 0.0
        %982 = vmatprep.subr.mxu0 0.0
        %983 = vmatpush1.msra.mxu0 0.0
        %984 = vmatprep.subr.mxu0 0.0
        %985 = vmatpush1.msra.mxu0 0.0
        %986 = vmatprep.subr.mxu0 0.0
        %987 = vmatpush1.msra.mxu0 0.0
        %988 = vmatprep.subr.mxu0 0.0
        %989 = vmatpush1.msra.mxu0 0.0
        %990 = vmatprep.subr.mxu0 %v742
        %991 = vmatpush1.msra.mxu0 %v741
        %992 = vmatprep.subr.mxu0 0.0
        %993 = vmatpush2.msra.mxu0 0.0
        %994 = vmatprep.subr.mxu0 0.0
        %995 = vmatpush2.msra.mxu0 0.0
        %996 = vmatprep.subr.mxu0 0.0
        %997 = vmatpush2.msra.mxu0 0.0
        %998 = vmatprep.subr.mxu0 0.0
        %999 = vmatpush2.msra.mxu0 0.0
        %1000 = vmatprep.subr.mxu0 0.0
        %1001 = vmatpush2.msra.mxu0 0.0
        %1002 = vmatprep.subr.mxu0 0.0
        %1003 = vmatpush2.msra.mxu0 0.0
        %1004 = vmatprep.subr.mxu0 0.0
        %1005 = vmatpush2.msra.mxu0 0.0
        %1006 = vmatprep.subr.mxu0 0.0
        %1007 = vmatpush2.msra.mxu0 0.0
        %1008 = vmatprep.subr.mxu0 0.0
        %1009 = vmatpush2.msra.mxu0 0.0
        %1010 = vmatprep.subr.mxu0 0.0
        %1011 = vmatpush2.msra.mxu0 0.0
        %1012 = vmatprep.subr.mxu0 0.0
        %1013 = vmatpush2.msra.mxu0 0.0
        %1014 = vmatprep.subr.mxu0 0.0
        %1015 = vmatpush2.msra.mxu0 0.0
        %1016 = vmatprep.subr.mxu0 0.0
        %1017 = vmatpush2.msra.mxu0 0.0
        %1018 = vmatprep.subr.mxu0 0.0
        %1019 = vmatpush2.msra.mxu0 0.0
        %1020 = vmatprep.subr.mxu0 0.0
        %1021 = vmatpush2.msra.mxu0 0.0
        %1022 = vmatprep.subr.mxu0 0.0
        %1023 = vmatpush2.msra.mxu0 0.0
        %1024 = vmatprep.mubr.f32.mxu0 0.0
        %1025 = vmatmul.mubr.f32.gmra.mxu0 %v745
        %v1026 = vpop.f32.mrf.mxu0
        %v1027 = vadd.f32 0.0, %v1026
        %v1028 = vpop.f32.mrf.mxu0
        %v1029 = vadd.f32 0.0, %v1028
        %1030 = vdwg.mxu0
        %v1031 = vadd.f32 %v726, %v814
        %v1032 = vadd.f32 %v727, %v816
        %v1033 = vadd.f32 %v728, %v885
        %v1034 = vadd.f32 %v729, %v887
        %v1035 = vadd.f32 %v730, %v956
        %v1036 = vadd.f32 %v731, %v958
        %v1037 = vadd.f32 %v732, %v1027
        %v1038 = vadd.f32 %v733, %v1029
        %v1039 = vmax.f32 %v1031, 0.0
        %v1040 = vmax.f32 %v1032, 0.0
        %v1041 = vmax.f32 %v1033, 0.0
        %v1042 = vmax.f32 %v1034, 0.0
        %v1043 = vmax.f32 %v1035, 0.0
        %v1044 = vmax.f32 %v1036, 0.0
        %v1045 = vmax.f32 %v1037, 0.0
        %v1046 = vmax.f32 %v1038, 0.0
        %v1047 = vld [vmem:[%s4] sm:$0xff]
        %v1048 = vld [vmem:[%s5] sm:$0xff]
        %1050 = vset.pattern.permute.xlu0 0
        %1051 = vperm.xlu0 %1050, %v1048
        %v1052 = vpop.permute.xlu0 %1051
        %v1055 = vsel %vm743, %v1047, 0
        %1057 = vmatprep.subr.mxu0 0.0
        %1058 = vmatpush1.msra.mxu0 0.0
        %1059 = vmatprep.subr.mxu0 0.0
        %1060 = vmatpush1.msra.mxu0 0.0
        %1061 = vmatprep.subr.mxu0 0.0
        %1062 = vmatpush1.msra.mxu0 0.0
        %1063 = vmatprep.subr.mxu0 0.0
        %1064 = vmatpush1.msra.mxu0 0.0
        %1065 = vmatprep.subr.mxu0 0.0
        %1066 = vmatpush1.msra.mxu0 0.0
        %1067 = vmatprep.subr.mxu0 0.0
        %1068 = vmatpush1.msra.mxu0 0.0
        %1069 = vmatprep.subr.mxu0 0.0
        %1070 = vmatpush1.msra.mxu0 0.0
        %1071 = vmatprep.subr.mxu0 0.0
        %1072 = vmatpush1.msra.mxu0 0.0
        %1073 = vmatprep.subr.mxu0 0.0
        %1074 = vmatpush1.msra.mxu0 0.0
        %1075 = vmatprep.subr.mxu0 0.0
        %1076 = vmatpush1.msra.mxu0 0.0
        %1077 = vmatprep.subr.mxu0 0.0
        %1078 = vmatpush1.msra.mxu0 0.0
        %1079 = vmatprep.subr.mxu0 0.0
        %1080 = vmatpush1.msra.mxu0 0.0
        %1081 = vmatprep.subr.mxu0 0.0
        %1082 = vmatpush1.msra.mxu0 0.0
        %1083 = vmatprep.subr.mxu0 0.0
        %1084 = vmatpush1.msra.mxu0 0.0
        %1085 = vmatprep.subr.mxu0 0.0
        %1086 = vmatpush1.msra.mxu0 0.0
        %1087 = vmatprep.subr.mxu0 %v1040
        %1088 = vmatpush1.msra.mxu0 %v1039
        %1089 = vmatprep.subr.mxu0 0.0
        %1090 = vmatpush2.msra.mxu0 0.0
        %1091 = vmatprep.subr.mxu0 0.0
        %1092 = vmatpush2.msra.mxu0 0.0
        %1093 = vmatprep.subr.mxu0 0.0
        %1094 = vmatpush2.msra.mxu0 0.0
        %1095 = vmatprep.subr.mxu0 0.0
        %1096 = vmatpush2.msra.mxu0 0.0
        %1097 = vmatprep.subr.mxu0 0.0
        %1098 = vmatpush2.msra.mxu0 0.0
        %1099 = vmatprep.subr.mxu0 0.0
        %1100 = vmatpush2.msra.mxu0 0.0
        %1101 = vmatprep.subr.mxu0 0.0
        %1102 = vmatpush2.msra.mxu0 0.0
        %1103 = vmatprep.subr.mxu0 0.0
        %1104 = vmatpush2.msra.mxu0 0.0
        %1105 = vmatprep.subr.mxu0 0.0
        %1106 = vmatpush2.msra.mxu0 0.0
        %1107 = vmatprep.subr.mxu0 0.0
        %1108 = vmatpush2.msra.mxu0 0.0
        %1109 = vmatprep.subr.mxu0 0.0
        %1110 = vmatpush2.msra.mxu0 0.0
        %1111 = vmatprep.subr.mxu0 0.0
        %1112 = vmatpush2.msra.mxu0 0.0
        %1113 = vmatprep.subr.mxu0 0.0
        %1114 = vmatpush2.msra.mxu0 0.0
        %1115 = vmatprep.subr.mxu0 0.0
        %1116 = vmatpush2.msra.mxu0 0.0
        %1117 = vmatprep.subr.mxu0 0.0
        %1118 = vmatpush2.msra.mxu0 0.0
        %1119 = vmatprep.subr.mxu0 0.0
        %1120 = vmatpush2.msra.mxu0 0.0
        %1121 = vmatprep.mubr.f32.mxu0 0.0
        %1122 = vmatmul.mubr.f32.gmra.mxu0 %v1055
        %v1123 = vpop.f32.mrf.mxu0
        %v1124 = vadd.f32 %v1052, %v1123
        %v1125 = vpop.f32.mrf.mxu0
        %v1126 = vadd.f32 %v1052, %v1125
        %1127 = vdwg.mxu0
        %1128 = vmatprep.subr.mxu0 0.0
        %1129 = vmatpush1.msra.mxu0 0.0
        %1130 = vmatprep.subr.mxu0 0.0
        %1131 = vmatpush1.msra.mxu0 0.0
        %1132 = vmatprep.subr.mxu0 0.0
        %1133 = vmatpush1.msra.mxu0 0.0
        %1134 = vmatprep.subr.mxu0 0.0
        %1135 = vmatpush1.msra.mxu0 0.0
        %1136 = vmatprep.subr.mxu0 0.0
        %1137 = vmatpush1.msra.mxu0 0.0
        %1138 = vmatprep.subr.mxu0 0.0
        %1139 = vmatpush1.msra.mxu0 0.0
        %1140 = vmatprep.subr.mxu0 0.0
        %1141 = vmatpush1.msra.mxu0 0.0
        %1142 = vmatprep.subr.mxu0 0.0
        %1143 = vmatpush1.msra.mxu0 0.0
        %1144 = vmatprep.subr.mxu0 0.0
        %1145 = vmatpush1.msra.mxu0 0.0
        %1146 = vmatprep.subr.mxu0 0.0
        %1147 = vmatpush1.msra.mxu0 0.0
        %1148 = vmatprep.subr.mxu0 0.0
        %1149 = vmatpush1.msra.mxu0 0.0
        %1150 = vmatprep.subr.mxu0 0.0
        %1151 = vmatpush1.msra.mxu0 0.0
        %1152 = vmatprep.subr.mxu0 0.0
        %1153 = vmatpush1.msra.mxu0 0.0
        %1154 = vmatprep.subr.mxu0 0.0
        %1155 = vmatpush1.msra.mxu0 0.0
        %1156 = vmatprep.subr.mxu0 0.0
        %1157 = vmatpush1.msra.mxu0 0.0
        %1158 = vmatprep.subr.mxu0 %v1042
        %1159 = vmatpush1.msra.mxu0 %v1041
        %1160 = vmatprep.subr.mxu0 0.0
        %1161 = vmatpush2.msra.mxu0 0.0
        %1162 = vmatprep.subr.mxu0 0.0
        %1163 = vmatpush2.msra.mxu0 0.0
        %1164 = vmatprep.subr.mxu0 0.0
        %1165 = vmatpush2.msra.mxu0 0.0
        %1166 = vmatprep.subr.mxu0 0.0
        %1167 = vmatpush2.msra.mxu0 0.0
        %1168 = vmatprep.subr.mxu0 0.0
        %1169 = vmatpush2.msra.mxu0 0.0
        %1170 = vmatprep.subr.mxu0 0.0
        %1171 = vmatpush2.msra.mxu0 0.0
        %1172 = vmatprep.subr.mxu0 0.0
        %1173 = vmatpush2.msra.mxu0 0.0
        %1174 = vmatprep.subr.mxu0 0.0
        %1175 = vmatpush2.msra.mxu0 0.0
        %1176 = vmatprep.subr.mxu0 0.0
        %1177 = vmatpush2.msra.mxu0 0.0
        %1178 = vmatprep.subr.mxu0 0.0
        %1179 = vmatpush2.msra.mxu0 0.0
        %1180 = vmatprep.subr.mxu0 0.0
        %1181 = vmatpush2.msra.mxu0 0.0
        %1182 = vmatprep.subr.mxu0 0.0
        %1183 = vmatpush2.msra.mxu0 0.0
        %1184 = vmatprep.subr.mxu0 0.0
        %1185 = vmatpush2.msra.mxu0 0.0
        %1186 = vmatprep.subr.mxu0 0.0
        %1187 = vmatpush2.msra.mxu0 0.0
        %1188 = vmatprep.subr.mxu0 0.0
        %1189 = vmatpush2.msra.mxu0 0.0
        %1190 = vmatprep.subr.mxu0 0.0
        %1191 = vmatpush2.msra.mxu0 0.0
        %1192 = vmatprep.mubr.f32.mxu0 0.0
        %1193 = vmatmul.mubr.f32.gmra.mxu0 %v1055
        %v1194 = vpop.f32.mrf.mxu0
        %v1195 = vadd.f32 %v1052, %v1194
        %v1196 = vpop.f32.mrf.mxu0
        %v1197 = vadd.f32 %v1052, %v1196
        %1198 = vdwg.mxu0
        %s1199 = sld [smem:[#allocation5]]
        %s1200 = sld [smem:[#allocation5 + $0x1]]
        %s1201 = sld [smem:[#allocation5 + $0x2]]
        %s1202 = ssub.f32 1.0, %s1199
        %v1203 = vstv %s1201
        %v1204 = vsub.f32 %v1124, %v1203
        %v1205 = vsub.f32 %v1126, %v1203
        %v1206 = vsub.f32 %v1195, %v1203
        %v1207 = vsub.f32 %v1197, %v1203
        %v1208 = vstv %s1200
        %v1209 = vmul.f32 %v1204, %v1208
        %v1210 = vmul.f32 %v1205, %v1208
        %v1211 = vmul.f32 %v1206, %v1208
        %v1212 = vmul.f32 %v1207, %v1208
        %v1213 = vxor.u32 %v1209, 2147483648
        %v1214 = vxor.u32 %v1210, 2147483648
        %v1215 = vxor.u32 %v1211, 2147483648
        %v1216 = vxor.u32 %v1212, 2147483648
        %v1217 = vmul.f32 %v1213, 1.442695
        %v1218 = vpow.pop %v1217
        %v1219 = vmul.f32 %v1214, 1.442695
        %v1220 = vpow.pop %v1219
        %v1221 = vmul.f32 %v1215, 1.442695
        %v1222 = vpow.pop %v1221
        %v1223 = vmul.f32 %v1216, 1.442695
        %v1224 = vpow.pop %v1223
        %v1225 = vadd.f32 %v1218, 1.0
        %v1226 = vadd.f32 %v1220, 1.0
        %v1227 = vadd.f32 %v1222, 1.0
        %v1228 = vadd.f32 %v1224, 1.0
        %v1229 = vrcp.pop %v1225
        %v1230 = vmul.f32 1.0, %v1229
        %v1231 = vrcp.pop %v1226
        %v1232 = vmul.f32 1.0, %v1231
        %v1233 = vrcp.pop %v1227
        %v1234 = vmul.f32 1.0, %v1233
        %v1235 = vrcp.pop %v1228
        %v1236 = vmul.f32 1.0, %v1235
        %v1237 = vstv %s1202
        %v1238 = vmul.f32 %v1237, %v1230
        %v1239 = vmul.f32 %v1237, %v1232
        %v1240 = vmul.f32 %v1237, %v1234
        %v1241 = vmul.f32 %v1237, %v1236
        %v1242 = vstv %s1199
        %v1243 = vadd.f32 %v1242, %v1238
        %v1244 = vadd.f32 %v1242, %v1239
        %v1245 = vadd.f32 %v1242, %v1240
        %v1246 = vadd.f32 %v1242, %v1241
        %v1247 = vmul.f32 %v1043, %v1243
        %v1248 = vmul.f32 %v1044, %v1244
        %v1249 = vmul.f32 %v1045, %v1245
        %v1250 = vmul.f32 %v1046, %v1246
        %1251 = vst [vmem:[#allocation2] sm:$0xff] %v1039
        %1252 = vst [vmem:[#allocation2 + $0x8] sm:$0xff] %v1040
        %1253 = vst [vmem:[#allocation2 + $0x10] sm:$0xff] %v1041
        %1254 = vst [vmem:[#allocation2 + $0x18] sm:$0xff] %v1042
        %1255 = vst [vmem:[#allocation2 + $0x20] sm:$0xff] %v1247
        %1256 = vst [vmem:[#allocation2 + $0x28] sm:$0xff] %v1248
        %1257 = vst [vmem:[#allocation2 + $0x30] sm:$0xff] %v1249
        %1258 = vst [vmem:[#allocation2 + $0x38] sm:$0xff] %v1250
        %p1259 = scmp.eq.s32.totalorder %s25, 3
        // Predicated region
        $region77: #{tpu_custom_call.1} parent=63 // pred_check
          %p1260 = pneg %p1259
        $region78: #{tpu_custom_call.1} parent=63 // pred_check_branch
          %1262 = sbr.rel (%p1260) target = $region80
        $region79: #{tpu_custom_call.1} parent=63 // pred_region
          %v1265 = vcombine.low %v1247, %v1248
          %v1267 = vunpack.c.l.s4 1966171168
          %v1268 = vunpack.c.0.s8 %v1267
          %v1269 = vlaneseq
          %v1270 = vshrl.u32 %v1269, 7
          %v1271 = vsub.s32 %v1268, %v1270
          %v1272 = vrot.slane %v1265, %v1271
          %v1274 = vunpack.c.l.s4 1966171168
          %v1275 = vunpack.c.0.s8 %v1274
          %v1276 = vlaneseq
          %v1277 = vshrl.u32 %v1276, 7
          %v1278 = vsub.s32 %v1275, %v1277
          %v1279 = vrot.slane %v1272, %v1278
          %v1281 = vlaneseq
          %vm1282 = vcmp.ge.s32.totalorder %v1281, 0
          %vm1283 = vcmp.lt.s32.totalorder %v1281, 256
          %vm1284 = vmand %vm1282, %vm1283
          %1285 = vst.msk [vmem:[#allocation4] ss:$2 sm:$0x3] %vm1284, %v1279
          %v1286 = vcombine.high %v1272, %v1272
          %v1288 = vunpack.c.l.s4 1966171168
          %v1289 = vunpack.c.0.s8 %v1288
          %v1290 = vlaneseq
          %v1291 = vshrl.u32 %v1290, 7
          %v1292 = vsub.s32 %v1289, %v1291
          %v1293 = vrot.slane %v1286, %v1292
          %s1295 = scalar_lea.vmem [#allocation4], 4
          %1296 = vst.msk [vmem:[%s1295] ss:$2 sm:$0x3] %vm1284, %v1293
          %v1297 = vcombine.high %v1279, %v1279
          %s1299 = scalar_lea.vmem [#allocation4], 8
          %1300 = vst.msk [vmem:[%s1299] ss:$2 sm:$0x3] %vm1284, %v1297
          %v1301 = vcombine.high %v1293, %v1293
          %s1303 = scalar_lea.vmem [#allocation4], 12
          %1304 = vst.msk [vmem:[%s1303] ss:$2 sm:$0x3] %vm1284, %v1301
          %v1305 = vcombine.high %v1247, %v1248
          %v1307 = vunpack.c.l.s4 1966171168
          %v1308 = vunpack.c.0.s8 %v1307
          %v1309 = vlaneseq
          %v1310 = vshrl.u32 %v1309, 7
          %v1311 = vsub.s32 %v1308, %v1310
          %v1312 = vrot.slane %v1305, %v1311
          %v1314 = vunpack.c.l.s4 1966171168
          %v1315 = vunpack.c.0.s8 %v1314
          %v1316 = vlaneseq
          %v1317 = vshrl.u32 %v1316, 7
          %v1318 = vsub.s32 %v1315, %v1317
          %v1319 = vrot.slane %v1312, %v1318
          %s1321 = scalar_lea.vmem [#allocation4], 16
          %1322 = vst.msk [vmem:[%s1321] ss:$2 sm:$0x3] %vm1284, %v1319
          %v1323 = vcombine.high %v1312, %v1312
          %v1325 = vunpack.c.l.s4 1966171168
          %v1326 = vunpack.c.0.s8 %v1325
          %v1327 = vlaneseq
          %v1328 = vshrl.u32 %v1327, 7
          %v1329 = vsub.s32 %v1326, %v1328
          %v1330 = vrot.slane %v1323, %v1329
          %s1332 = scalar_lea.vmem [#allocation4], 20
          %1333 = vst.msk [vmem:[%s1332] ss:$2 sm:$0x3] %vm1284, %v1330
          %v1334 = vcombine.high %v1319, %v1319
          %s1336 = scalar_lea.vmem [#allocation4], 24
          %1337 = vst.msk [vmem:[%s1336] ss:$2 sm:$0x3] %vm1284, %v1334
          %v1338 = vcombine.high %v1330, %v1330
          %s1340 = scalar_lea.vmem [#allocation4], 28
          %1341 = vst.msk [vmem:[%s1340] ss:$2 sm:$0x3] %vm1284, %v1338
          %v1344 = vcombine.low %v1249, %v1250
          %v1346 = vunpack.c.l.s4 1966171168
          %v1347 = vunpack.c.0.s8 %v1346
          %v1348 = vlaneseq
          %v1349 = vshrl.u32 %v1348, 7
          %v1350 = vsub.s32 %v1347, %v1349
          %v1351 = vrot.slane %v1344, %v1350
          %v1353 = vunpack.c.l.s4 1966171168
          %v1354 = vunpack.c.0.s8 %v1353
          %v1355 = vlaneseq
          %v1356 = vshrl.u32 %v1355, 7
          %v1357 = vsub.s32 %v1354, %v1356
          %v1358 = vrot.slane %v1351, %v1357
          %s1360 = scalar_lea.vmem [#allocation4], 1
          %1361 = vst.msk [vmem:[%s1360] ss:$2 sm:$0x3] %vm1284, %v1358
          %v1362 = vcombine.high %v1351, %v1351
          %v1364 = vunpack.c.l.s4 1966171168
          %v1365 = vunpack.c.0.s8 %v1364
          %v1366 = vlaneseq
          %v1367 = vshrl.u32 %v1366, 7
          %v1368 = vsub.s32 %v1365, %v1367
          %v1369 = vrot.slane %v1362, %v1368
          %s1371 = scalar_lea.vmem [#allocation4], 5
          %1372 = vst.msk [vmem:[%s1371] ss:$2 sm:$0x3] %vm1284, %v1369
          %v1373 = vcombine.high %v1358, %v1358
          %s1375 = scalar_lea.vmem [#allocation4], 9
          %1376 = vst.msk [vmem:[%s1375] ss:$2 sm:$0x3] %vm1284, %v1373
          %v1377 = vcombine.high %v1369, %v1369
          %s1379 = scalar_lea.vmem [#allocation4], 13
          %1380 = vst.msk [vmem:[%s1379] ss:$2 sm:$0x3] %vm1284, %v1377
          %v1381 = vcombine.high %v1249, %v1250
          %v1383 = vunpack.c.l.s4 1966171168
          %v1384 = vunpack.c.0.s8 %v1383
          %v1385 = vlaneseq
          %v1386 = vshrl.u32 %v1385, 7
          %v1387 = vsub.s32 %v1384, %v1386
          %v1388 = vrot.slane %v1381, %v1387
          %v1390 = vunpack.c.l.s4 1966171168
          %v1391 = vunpack.c.0.s8 %v1390
          %v1392 = vlaneseq
          %v1393 = vshrl.u32 %v1392, 7
          %v1394 = vsub.s32 %v1391, %v1393
          %v1395 = vrot.slane %v1388, %v1394
          %s1397 = scalar_lea.vmem [#allocation4], 17
          %1398 = vst.msk [vmem:[%s1397] ss:$2 sm:$0x3] %vm1284, %v1395
          %v1399 = vcombine.high %v1388, %v1388
          %v1401 = vunpack.c.l.s4 1966171168
          %v1402 = vunpack.c.0.s8 %v1401
          %v1403 = vlaneseq
          %v1404 = vshrl.u32 %v1403, 7
          %v1405 = vsub.s32 %v1402, %v1404
          %v1406 = vrot.slane %v1399, %v1405
          %s1408 = scalar_lea.vmem [#allocation4], 21
          %1409 = vst.msk [vmem:[%s1408] ss:$2 sm:$0x3] %vm1284, %v1406
          %v1410 = vcombine.high %v1395, %v1395
          %s1412 = scalar_lea.vmem [#allocation4], 25
          %1413 = vst.msk [vmem:[%s1412] ss:$2 sm:$0x3] %vm1284, %v1410
          %v1414 = vcombine.high %v1406, %v1406
          %s1416 = scalar_lea.vmem [#allocation4], 29
          %1417 = vst.msk [vmem:[%s1416] ss:$2 sm:$0x3] %vm1284, %v1414
          %v1418 = vld [vmem:[#allocation4] sm:$0xff]
          %v1419 = vld [vmem:[#allocation4 + $0x8] sm:$0xff]
          %v1420 = vld [vmem:[#allocation4 + $0x10] sm:$0xff]
          %v1421 = vld [vmem:[#allocation4 + $0x18] sm:$0xff]
          %v1422 = vld [vmem:[#allocation9] sm:$0xff]
          %v1423 = vld [vmem:[#allocation9 + $0x8] sm:$0xff]
          %v1424 = vld [vmem:[#allocation9 + $0x10] sm:$0xff]
          %v1425 = vld [vmem:[#allocation9 + $0x18] sm:$0xff]
          %v1426 = vld [vmem:[#allocation9 + $0x20] sm:$0xff]
          %v1427 = vld [vmem:[#allocation9 + $0x28] sm:$0xff]
          %v1428 = vld [vmem:[#allocation9 + $0x30] sm:$0xff]
          %v1429 = vld [vmem:[#allocation9 + $0x38] sm:$0xff]
          %v1430 = vld [vmem:[#allocation9 + $0x40] sm:$0xff]
          %v1431 = vld [vmem:[#allocation9 + $0x48] sm:$0xff]
          %v1432 = vld [vmem:[#allocation9 + $0x50] sm:$0xff]
          %v1433 = vld [vmem:[#allocation9 + $0x58] sm:$0xff]
          %v1434 = vld [vmem:[#allocation9 + $0x60] sm:$0xff]
          %v1435 = vld [vmem:[#allocation9 + $0x68] sm:$0xff]
          %v1436 = vld [vmem:[#allocation9 + $0x70] sm:$0xff]
          %v1437 = vld [vmem:[#allocation9 + $0x78] sm:$0xff]
          %v1438 = vld [vmem:[#allocation9 + $0x80] sm:$0xff]
          %v1439 = vld [vmem:[#allocation9 + $0x88] sm:$0xff]
          %v1440 = vld [vmem:[#allocation9 + $0x90] sm:$0xff]
          %v1441 = vld [vmem:[#allocation9 + $0x98] sm:$0xff]
          %v1442 = vld [vmem:[#allocation9 + $0xa0] sm:$0xff]
          %v1443 = vld [vmem:[#allocation9 + $0xa8] sm:$0xff]
          %v1444 = vld [vmem:[#allocation9 + $0xb0] sm:$0xff]
          %v1445 = vld [vmem:[#allocation9 + $0xb8] sm:$0xff]
          %v1446 = vld [vmem:[#allocation9 + $0xc0] sm:$0xff]
          %v1447 = vld [vmem:[#allocation9 + $0xc8] sm:$0xff]
          %v1448 = vld [vmem:[#allocation9 + $0xd0] sm:$0xff]
          %v1449 = vld [vmem:[#allocation9 + $0xd8] sm:$0xff]
          %v1450 = vld [vmem:[#allocation9 + $0xe0] sm:$0xff]
          %v1451 = vld [vmem:[#allocation9 + $0xe8] sm:$0xff]
          %v1452 = vld [vmem:[#allocation9 + $0xf0] sm:$0xff]
          %v1453 = vld [vmem:[#allocation9 + $0xf8] sm:$0xff]
          %v1454 = vld [vmem:[#allocation9 + $0x100] sm:$0xff]
          %v1455 = vld [vmem:[#allocation9 + $0x108] sm:$0xff]
          %v1456 = vld [vmem:[#allocation9 + $0x110] sm:$0xff]
          %v1457 = vld [vmem:[#allocation9 + $0x118] sm:$0xff]
          %v1458 = vld [vmem:[#allocation9 + $0x120] sm:$0xff]
          %v1459 = vld [vmem:[#allocation9 + $0x128] sm:$0xff]
          %v1460 = vld [vmem:[#allocation9 + $0x130] sm:$0xff]
          %v1461 = vld [vmem:[#allocation9 + $0x138] sm:$0xff]
          %v1462 = vld [vmem:[#allocation9 + $0x140] sm:$0xff]
          %v1463 = vld [vmem:[#allocation9 + $0x148] sm:$0xff]
          %v1464 = vld [vmem:[#allocation9 + $0x150] sm:$0xff]
          %v1465 = vld [vmem:[#allocation9 + $0x158] sm:$0xff]
          %v1466 = vld [vmem:[#allocation9 + $0x160] sm:$0xff]
          %v1467 = vld [vmem:[#allocation9 + $0x168] sm:$0xff]
          %v1468 = vld [vmem:[#allocation9 + $0x170] sm:$0xff]
          %v1469 = vld [vmem:[#allocation9 + $0x178] sm:$0xff]
          %v1470 = vld [vmem:[#allocation9 + $0x180] sm:$0xff]
          %v1471 = vld [vmem:[#allocation9 + $0x188] sm:$0xff]
          %v1472 = vld [vmem:[#allocation9 + $0x190] sm:$0xff]
          %v1473 = vld [vmem:[#allocation9 + $0x198] sm:$0xff]
          %v1474 = vld [vmem:[#allocation9 + $0x1a0] sm:$0xff]
          %v1475 = vld [vmem:[#allocation9 + $0x1a8] sm:$0xff]
          %v1476 = vld [vmem:[#allocation9 + $0x1b0] sm:$0xff]
          %v1477 = vld [vmem:[#allocation9 + $0x1b8] sm:$0xff]
          %v1478 = vld [vmem:[#allocation9 + $0x1c0] sm:$0xff]
          %v1479 = vld [vmem:[#allocation9 + $0x1c8] sm:$0xff]
          %v1480 = vld [vmem:[#allocation9 + $0x1d0] sm:$0xff]
          %v1481 = vld [vmem:[#allocation9 + $0x1d8] sm:$0xff]
          %v1482 = vld [vmem:[#allocation9 + $0x1e0] sm:$0xff]
          %v1483 = vld [vmem:[#allocation9 + $0x1e8] sm:$0xff]
          %v1484 = vld [vmem:[#allocation9 + $0x1f0] sm:$0xff]
          %v1485 = vld [vmem:[#allocation9 + $0x1f8] sm:$0xff]
          %v1486 = vld [vmem:[#allocation9 + $0x200] sm:$0xff]
          %v1487 = vld [vmem:[#allocation9 + $0x208] sm:$0xff]
          %v1488 = vld [vmem:[#allocation9 + $0x210] sm:$0xff]
          %v1489 = vld [vmem:[#allocation9 + $0x218] sm:$0xff]
          %v1490 = vld [vmem:[#allocation9 + $0x220] sm:$0xff]
          %v1491 = vld [vmem:[#allocation9 + $0x228] sm:$0xff]
          %v1492 = vld [vmem:[#allocation9 + $0x230] sm:$0xff]
          %v1493 = vld [vmem:[#allocation9 + $0x238] sm:$0xff]
          %v1494 = vld [vmem:[#allocation9 + $0x240] sm:$0xff]
          %v1495 = vld [vmem:[#allocation9 + $0x248] sm:$0xff]
          %v1496 = vld [vmem:[#allocation9 + $0x250] sm:$0xff]
          %v1497 = vld [vmem:[#allocation9 + $0x258] sm:$0xff]
          %v1498 = vld [vmem:[#allocation9 + $0x260] sm:$0xff]
          %v1499 = vld [vmem:[#allocation9 + $0x268] sm:$0xff]
          %v1500 = vld [vmem:[#allocation9 + $0x270] sm:$0xff]
          %v1501 = vld [vmem:[#allocation9 + $0x278] sm:$0xff]
          %v1502 = vld [vmem:[#allocation9 + $0x280] sm:$0xff]
          %v1503 = vld [vmem:[#allocation9 + $0x288] sm:$0xff]
          %v1504 = vld [vmem:[#allocation9 + $0x290] sm:$0xff]
          %v1505 = vld [vmem:[#allocation9 + $0x298] sm:$0xff]
          %v1506 = vld [vmem:[#allocation9 + $0x2a0] sm:$0xff]
          %v1507 = vld [vmem:[#allocation9 + $0x2a8] sm:$0xff]
          %v1508 = vld [vmem:[#allocation9 + $0x2b0] sm:$0xff]
          %v1509 = vld [vmem:[#allocation9 + $0x2b8] sm:$0xff]
          %v1510 = vld [vmem:[#allocation9 + $0x2c0] sm:$0xff]
          %v1511 = vld [vmem:[#allocation9 + $0x2c8] sm:$0xff]
          %v1512 = vld [vmem:[#allocation9 + $0x2d0] sm:$0xff]
          %v1513 = vld [vmem:[#allocation9 + $0x2d8] sm:$0xff]
          %v1514 = vld [vmem:[#allocation9 + $0x2e0] sm:$0xff]
          %v1515 = vld [vmem:[#allocation9 + $0x2e8] sm:$0xff]
          %v1516 = vld [vmem:[#allocation9 + $0x2f0] sm:$0xff]
          %v1517 = vld [vmem:[#allocation9 + $0x2f8] sm:$0xff]
          %v1518 = vld [vmem:[#allocation9 + $0x300] sm:$0xff]
          %v1519 = vld [vmem:[#allocation9 + $0x308] sm:$0xff]
          %v1520 = vld [vmem:[#allocation9 + $0x310] sm:$0xff]
          %v1521 = vld [vmem:[#allocation9 + $0x318] sm:$0xff]
          %v1522 = vld [vmem:[#allocation9 + $0x320] sm:$0xff]
          %v1523 = vld [vmem:[#allocation9 + $0x328] sm:$0xff]
          %v1524 = vld [vmem:[#allocation9 + $0x330] sm:$0xff]
          %v1525 = vld [vmem:[#allocation9 + $0x338] sm:$0xff]
          %v1526 = vld [vmem:[#allocation9 + $0x340] sm:$0xff]
          %v1527 = vld [vmem:[#allocation9 + $0x348] sm:$0xff]
          %v1528 = vld [vmem:[#allocation9 + $0x350] sm:$0xff]
          %v1529 = vld [vmem:[#allocation9 + $0x358] sm:$0xff]
          %v1530 = vld [vmem:[#allocation9 + $0x360] sm:$0xff]
          %v1531 = vld [vmem:[#allocation9 + $0x368] sm:$0xff]
          %v1532 = vld [vmem:[#allocation9 + $0x370] sm:$0xff]
          %v1533 = vld [vmem:[#allocation9 + $0x378] sm:$0xff]
          %v1534 = vld [vmem:[#allocation9 + $0x380] sm:$0xff]
          %v1535 = vld [vmem:[#allocation9 + $0x388] sm:$0xff]
          %v1536 = vld [vmem:[#allocation9 + $0x390] sm:$0xff]
          %v1537 = vld [vmem:[#allocation9 + $0x398] sm:$0xff]
          %v1538 = vld [vmem:[#allocation9 + $0x3a0] sm:$0xff]
          %v1539 = vld [vmem:[#allocation9 + $0x3a8] sm:$0xff]
          %v1540 = vld [vmem:[#allocation9 + $0x3b0] sm:$0xff]
          %v1541 = vld [vmem:[#allocation9 + $0x3b8] sm:$0xff]
          %v1542 = vld [vmem:[#allocation9 + $0x3c0] sm:$0xff]
          %v1543 = vld [vmem:[#allocation9 + $0x3c8] sm:$0xff]
          %v1544 = vld [vmem:[#allocation9 + $0x3d0] sm:$0xff]
          %v1545 = vld [vmem:[#allocation9 + $0x3d8] sm:$0xff]
          %v1546 = vld [vmem:[#allocation9 + $0x3e0] sm:$0xff]
          %v1547 = vld [vmem:[#allocation9 + $0x3e8] sm:$0xff]
          %v1548 = vld [vmem:[#allocation9 + $0x3f0] sm:$0xff]
          %v1549 = vld [vmem:[#allocation9 + $0x3f8] sm:$0xff]
          %v1550 = vld [vmem:[#allocation9 + $0x400] sm:$0xff]
          %v1551 = vld [vmem:[#allocation9 + $0x408] sm:$0xff]
          %v1552 = vld [vmem:[#allocation9 + $0x410] sm:$0xff]
          %v1553 = vld [vmem:[#allocation9 + $0x418] sm:$0xff]
          %v1554 = vld [vmem:[#allocation9 + $0x420] sm:$0xff]
          %v1555 = vld [vmem:[#allocation9 + $0x428] sm:$0xff]
          %v1556 = vld [vmem:[#allocation9 + $0x430] sm:$0xff]
          %v1557 = vld [vmem:[#allocation9 + $0x438] sm:$0xff]
          %v1558 = vld [vmem:[#allocation9 + $0x440] sm:$0xff]
          %v1559 = vld [vmem:[#allocation9 + $0x448] sm:$0xff]
          %v1560 = vld [vmem:[#allocation9 + $0x450] sm:$0xff]
          %v1561 = vld [vmem:[#allocation9 + $0x458] sm:$0xff]
          %v1562 = vld [vmem:[#allocation9 + $0x460] sm:$0xff]
          %v1563 = vld [vmem:[#allocation9 + $0x468] sm:$0xff]
          %v1564 = vld [vmem:[#allocation9 + $0x470] sm:$0xff]
          %v1565 = vld [vmem:[#allocation9 + $0x478] sm:$0xff]
          %v1566 = vld [vmem:[#allocation9 + $0x480] sm:$0xff]
          %v1567 = vld [vmem:[#allocation9 + $0x488] sm:$0xff]
          %v1568 = vld [vmem:[#allocation9 + $0x490] sm:$0xff]
          %v1569 = vld [vmem:[#allocation9 + $0x498] sm:$0xff]
          %v1570 = vld [vmem:[#allocation9 + $0x4a0] sm:$0xff]
          %v1571 = vld [vmem:[#allocation9 + $0x4a8] sm:$0xff]
          %v1572 = vld [vmem:[#allocation9 + $0x4b0] sm:$0xff]
          %v1573 = vld [vmem:[#allocation9 + $0x4b8] sm:$0xff]
          %v1574 = vld [vmem:[#allocation9 + $0x4c0] sm:$0xff]
          %v1575 = vld [vmem:[#allocation9 + $0x4c8] sm:$0xff]
          %v1576 = vld [vmem:[#allocation9 + $0x4d0] sm:$0xff]
          %v1577 = vld [vmem:[#allocation9 + $0x4d8] sm:$0xff]
          %v1578 = vld [vmem:[#allocation9 + $0x4e0] sm:$0xff]
          %v1579 = vld [vmem:[#allocation9 + $0x4e8] sm:$0xff]
          %v1580 = vld [vmem:[#allocation9 + $0x4f0] sm:$0xff]
          %v1581 = vld [vmem:[#allocation9 + $0x4f8] sm:$0xff]
          %v1582 = vld [vmem:[#allocation9 + $0x500] sm:$0xff]
          %v1583 = vld [vmem:[#allocation9 + $0x508] sm:$0xff]
          %v1584 = vld [vmem:[#allocation9 + $0x510] sm:$0xff]
          %v1585 = vld [vmem:[#allocation9 + $0x518] sm:$0xff]
          %v1586 = vld [vmem:[#allocation9 + $0x520] sm:$0xff]
          %v1587 = vld [vmem:[#allocation9 + $0x528] sm:$0xff]
          %v1588 = vld [vmem:[#allocation9 + $0x530] sm:$0xff]
          %v1589 = vld [vmem:[#allocation9 + $0x538] sm:$0xff]
          %v1590 = vld [vmem:[#allocation9 + $0x540] sm:$0xff]
          %v1591 = vld [vmem:[#allocation9 + $0x548] sm:$0xff]
          %v1592 = vld [vmem:[#allocation9 + $0x550] sm:$0xff]
          %v1593 = vld [vmem:[#allocation9 + $0x558] sm:$0xff]
          %v1594 = vld [vmem:[#allocation9 + $0x560] sm:$0xff]
          %v1595 = vld [vmem:[#allocation9 + $0x568] sm:$0xff]
          %v1596 = vld [vmem:[#allocation9 + $0x570] sm:$0xff]
          %v1597 = vld [vmem:[#allocation9 + $0x578] sm:$0xff]
          %v1598 = vld [vmem:[#allocation9 + $0x580] sm:$0xff]
          %v1599 = vld [vmem:[#allocation9 + $0x588] sm:$0xff]
          %v1600 = vld [vmem:[#allocation9 + $0x590] sm:$0xff]
          %v1601 = vld [vmem:[#allocation9 + $0x598] sm:$0xff]
          %v1602 = vld [vmem:[#allocation9 + $0x5a0] sm:$0xff]
          %v1603 = vld [vmem:[#allocation9 + $0x5a8] sm:$0xff]
          %v1604 = vld [vmem:[#allocation9 + $0x5b0] sm:$0xff]
          %v1605 = vld [vmem:[#allocation9 + $0x5b8] sm:$0xff]
          %v1606 = vld [vmem:[#allocation9 + $0x5c0] sm:$0xff]
          %v1607 = vld [vmem:[#allocation9 + $0x5c8] sm:$0xff]
          %v1608 = vld [vmem:[#allocation9 + $0x5d0] sm:$0xff]
          %v1609 = vld [vmem:[#allocation9 + $0x5d8] sm:$0xff]
          %v1610 = vld [vmem:[#allocation9 + $0x5e0] sm:$0xff]
          %v1611 = vld [vmem:[#allocation9 + $0x5e8] sm:$0xff]
          %v1612 = vld [vmem:[#allocation9 + $0x5f0] sm:$0xff]
          %v1613 = vld [vmem:[#allocation9 + $0x5f8] sm:$0xff]
          %v1614 = vld [vmem:[#allocation9 + $0x600] sm:$0xff]
          %v1615 = vld [vmem:[#allocation9 + $0x608] sm:$0xff]
          %v1616 = vld [vmem:[#allocation9 + $0x610] sm:$0xff]
          %v1617 = vld [vmem:[#allocation9 + $0x618] sm:$0xff]
          %v1618 = vld [vmem:[#allocation9 + $0x620] sm:$0xff]
          %v1619 = vld [vmem:[#allocation9 + $0x628] sm:$0xff]
          %v1620 = vld [vmem:[#allocation9 + $0x630] sm:$0xff]
          %v1621 = vld [vmem:[#allocation9 + $0x638] sm:$0xff]
          %v1622 = vld [vmem:[#allocation9 + $0x640] sm:$0xff]
          %v1623 = vld [vmem:[#allocation9 + $0x648] sm:$0xff]
          %v1624 = vld [vmem:[#allocation9 + $0x650] sm:$0xff]
          %v1625 = vld [vmem:[#allocation9 + $0x658] sm:$0xff]
          %v1626 = vld [vmem:[#allocation9 + $0x660] sm:$0xff]
          %v1627 = vld [vmem:[#allocation9 + $0x668] sm:$0xff]
          %v1628 = vld [vmem:[#allocation9 + $0x670] sm:$0xff]
          %v1629 = vld [vmem:[#allocation9 + $0x678] sm:$0xff]
          %v1630 = vld [vmem:[#allocation9 + $0x680] sm:$0xff]
          %v1631 = vld [vmem:[#allocation9 + $0x688] sm:$0xff]
          %v1632 = vld [vmem:[#allocation9 + $0x690] sm:$0xff]
          %v1633 = vld [vmem:[#allocation9 + $0x698] sm:$0xff]
          %v1634 = vld [vmem:[#allocation9 + $0x6a0] sm:$0xff]
          %v1635 = vld [vmem:[#allocation9 + $0x6a8] sm:$0xff]
          %v1636 = vld [vmem:[#allocation9 + $0x6b0] sm:$0xff]
          %v1637 = vld [vmem:[#allocation9 + $0x6b8] sm:$0xff]
          %v1638 = vld [vmem:[#allocation9 + $0x6c0] sm:$0xff]
          %v1639 = vld [vmem:[#allocation9 + $0x6c8] sm:$0xff]
          %v1640 = vld [vmem:[#allocation9 + $0x6d0] sm:$0xff]
          %v1641 = vld [vmem:[#allocation9 + $0x6d8] sm:$0xff]
          %v1642 = vld [vmem:[#allocation9 + $0x6e0] sm:$0xff]
          %v1643 = vld [vmem:[#allocation9 + $0x6e8] sm:$0xff]
          %v1644 = vld [vmem:[#allocation9 + $0x6f0] sm:$0xff]
          %v1645 = vld [vmem:[#allocation9 + $0x6f8] sm:$0xff]
          %v1646 = vld [vmem:[#allocation9 + $0x700] sm:$0xff]
          %v1647 = vld [vmem:[#allocation9 + $0x708] sm:$0xff]
          %v1648 = vld [vmem:[#allocation9 + $0x710] sm:$0xff]
          %v1649 = vld [vmem:[#allocation9 + $0x718] sm:$0xff]
          %v1650 = vld [vmem:[#allocation9 + $0x720] sm:$0xff]
          %v1651 = vld [vmem:[#allocation9 + $0x728] sm:$0xff]
          %v1652 = vld [vmem:[#allocation9 + $0x730] sm:$0xff]
          %v1653 = vld [vmem:[#allocation9 + $0x738] sm:$0xff]
          %v1654 = vld [vmem:[#allocation9 + $0x740] sm:$0xff]
          %v1655 = vld [vmem:[#allocation9 + $0x748] sm:$0xff]
          %v1656 = vld [vmem:[#allocation9 + $0x750] sm:$0xff]
          %v1657 = vld [vmem:[#allocation9 + $0x758] sm:$0xff]
          %v1658 = vld [vmem:[#allocation9 + $0x760] sm:$0xff]
          %v1659 = vld [vmem:[#allocation9 + $0x768] sm:$0xff]
          %v1660 = vld [vmem:[#allocation9 + $0x770] sm:$0xff]
          %v1661 = vld [vmem:[#allocation9 + $0x778] sm:$0xff]
          %v1662 = vld [vmem:[#allocation9 + $0x780] sm:$0xff]
          %v1663 = vld [vmem:[#allocation9 + $0x788] sm:$0xff]
          %v1664 = vld [vmem:[#allocation9 + $0x790] sm:$0xff]
          %v1665 = vld [vmem:[#allocation9 + $0x798] sm:$0xff]
          %v1666 = vld [vmem:[#allocation9 + $0x7a0] sm:$0xff]
          %v1667 = vld [vmem:[#allocation9 + $0x7a8] sm:$0xff]
          %v1668 = vld [vmem:[#allocation9 + $0x7b0] sm:$0xff]
          %v1669 = vld [vmem:[#allocation9 + $0x7b8] sm:$0xff]
          %v1670 = vld [vmem:[#allocation9 + $0x7c0] sm:$0xff]
          %v1671 = vld [vmem:[#allocation9 + $0x7c8] sm:$0xff]
          %v1672 = vld [vmem:[#allocation9 + $0x7d0] sm:$0xff]
          %v1673 = vld [vmem:[#allocation9 + $0x7d8] sm:$0xff]
          %v1674 = vld [vmem:[#allocation9 + $0x7e0] sm:$0xff]
          %v1675 = vld [vmem:[#allocation9 + $0x7e8] sm:$0xff]
          %v1676 = vld [vmem:[#allocation9 + $0x7f0] sm:$0xff]
          %v1677 = vld [vmem:[#allocation9 + $0x7f8] sm:$0xff]
          %v1678 = vld [vmem:[%s8] sm:$0x1]
          %v1680 = vlaneseq
          %v1681 = vshrl.u32 %v1680, 7
          %v1682 = vsub.s32 0, %v1681
          %v1683 = vrot.slane %v1678, %v1682
          %v1689 = vcombine.high %v1418, %v1418
          %v1691 = vunpack.c.l.s4 1983009808
          %v1692 = vunpack.c.0.s8 %v1691
          %v1693 = vlaneseq
          %v1694 = vshrl.u32 %v1693, 7
          %v1695 = vsub.s32 %v1692, %v1694
          %v1696 = vrot.slane %v1418, %v1695
          %v1698 = vunpack.c.l.s4 1983009808
          %v1699 = vunpack.c.0.s8 %v1698
          %v1700 = vlaneseq
          %v1701 = vshrl.u32 %v1700, 7
          %v1702 = vsub.s32 %v1699, %v1701
          %v1703 = vrot.slane %v1689, %v1702
          %v1704 = vcombine.high %v1696, %v1696
          %v1705 = vcombine.high %v1703, %v1703
          %v1706 = vcombine.high %v1419, %v1419
          %v1708 = vunpack.c.l.s4 1983009808
          %v1709 = vunpack.c.0.s8 %v1708
          %v1710 = vlaneseq
          %v1711 = vshrl.u32 %v1710, 7
          %v1712 = vsub.s32 %v1709, %v1711
          %v1713 = vrot.slane %v1419, %v1712
          %v1715 = vunpack.c.l.s4 1983009808
          %v1716 = vunpack.c.0.s8 %v1715
          %v1717 = vlaneseq
          %v1718 = vshrl.u32 %v1717, 7
          %v1719 = vsub.s32 %v1716, %v1718
          %v1720 = vrot.slane %v1706, %v1719
          %v1721 = vcombine.high %v1713, %v1713
          %v1722 = vcombine.high %v1720, %v1720
          %v1723 = vcombine.high %v1420, %v1420
          %v1725 = vunpack.c.l.s4 1983009808
          %v1726 = vunpack.c.0.s8 %v1725
          %v1727 = vlaneseq
          %v1728 = vshrl.u32 %v1727, 7
          %v1729 = vsub.s32 %v1726, %v1728
          %v1730 = vrot.slane %v1420, %v1729
          %v1732 = vunpack.c.l.s4 1983009808
          %v1733 = vunpack.c.0.s8 %v1732
          %v1734 = vlaneseq
          %v1735 = vshrl.u32 %v1734, 7
          %v1736 = vsub.s32 %v1733, %v1735
          %v1737 = vrot.slane %v1723, %v1736
          %v1738 = vcombine.high %v1730, %v1730
          %v1739 = vcombine.high %v1737, %v1737
          %v1740 = vcombine.high %v1421, %v1421
          %v1742 = vunpack.c.l.s4 1983009808
          %v1743 = vunpack.c.0.s8 %v1742
          %v1744 = vlaneseq
          %v1745 = vshrl.u32 %v1744, 7
          %v1746 = vsub.s32 %v1743, %v1745
          %v1747 = vrot.slane %v1421, %v1746
          %v1749 = vunpack.c.l.s4 1983009808
          %v1750 = vunpack.c.0.s8 %v1749
          %v1751 = vlaneseq
          %v1752 = vshrl.u32 %v1751, 7
          %v1753 = vsub.s32 %v1750, %v1752
          %v1754 = vrot.slane %v1740, %v1753
          %v1755 = vcombine.high %v1747, %v1747
          %v1756 = vcombine.high %v1754, %v1754
          %1773 = vmatprep.subr.mxu0 0.0
          %1774 = vmatpush1.msra.mxu0 %v1437
          %1775 = vmatprep.subr.mxu0 0.0
          %1776 = vmatpush1.msra.mxu0 %v1436
          %1777 = vmatprep.subr.mxu0 0.0
          %1778 = vmatpush1.msra.mxu0 %v1435
          %1779 = vmatprep.subr.mxu0 0.0
          %1780 = vmatpush1.msra.mxu0 %v1434
          %1781 = vmatprep.subr.mxu0 0.0
          %1782 = vmatpush1.msra.mxu0 %v1433
          %1783 = vmatprep.subr.mxu0 0.0
          %1784 = vmatpush1.msra.mxu0 %v1432
          %1785 = vmatprep.subr.mxu0 0.0
          %1786 = vmatpush1.msra.mxu0 %v1431
          %1787 = vmatprep.subr.mxu0 0.0
          %1788 = vmatpush1.msra.mxu0 %v1430
          %1789 = vmatprep.subr.mxu0 0.0
          %1790 = vmatpush1.msra.mxu0 %v1429
          %1791 = vmatprep.subr.mxu0 0.0
          %1792 = vmatpush1.msra.mxu0 %v1428
          %1793 = vmatprep.subr.mxu0 0.0
          %1794 = vmatpush1.msra.mxu0 %v1427
          %1795 = vmatprep.subr.mxu0 0.0
          %1796 = vmatpush1.msra.mxu0 %v1426
          %1797 = vmatprep.subr.mxu0 0.0
          %1798 = vmatpush1.msra.mxu0 %v1425
          %1799 = vmatprep.subr.mxu0 0.0
          %1800 = vmatpush1.msra.mxu0 %v1424
          %1801 = vmatprep.subr.mxu0 0.0
          %1802 = vmatpush1.msra.mxu0 %v1423
          %1803 = vmatprep.subr.mxu0 0.0
          %1804 = vmatpush1.msra.mxu0 %v1422
          %1805 = vmatprep.subr.mxu0 0.0
          %1806 = vmatpush2.msra.mxu0 %v1453
          %1807 = vmatprep.subr.mxu0 0.0
          %1808 = vmatpush2.msra.mxu0 %v1452
          %1809 = vmatprep.subr.mxu0 0.0
          %1810 = vmatpush2.msra.mxu0 %v1451
          %1811 = vmatprep.subr.mxu0 0.0
          %1812 = vmatpush2.msra.mxu0 %v1450
          %1813 = vmatprep.subr.mxu0 0.0
          %1814 = vmatpush2.msra.mxu0 %v1449
          %1815 = vmatprep.subr.mxu0 0.0
          %1816 = vmatpush2.msra.mxu0 %v1448
          %1817 = vmatprep.subr.mxu0 0.0
          %1818 = vmatpush2.msra.mxu0 %v1447
          %1819 = vmatprep.subr.mxu0 0.0
          %1820 = vmatpush2.msra.mxu0 %v1446
          %1821 = vmatprep.subr.mxu0 0.0
          %1822 = vmatpush2.msra.mxu0 %v1445
          %1823 = vmatprep.subr.mxu0 0.0
          %1824 = vmatpush2.msra.mxu0 %v1444
          %1825 = vmatprep.subr.mxu0 0.0
          %1826 = vmatpush2.msra.mxu0 %v1443
          %1827 = vmatprep.subr.mxu0 0.0
          %1828 = vmatpush2.msra.mxu0 %v1442
          %1829 = vmatprep.subr.mxu0 0.0
          %1830 = vmatpush2.msra.mxu0 %v1441
          %1831 = vmatprep.subr.mxu0 0.0
          %1832 = vmatpush2.msra.mxu0 %v1440
          %1833 = vmatprep.subr.mxu0 0.0
          %1834 = vmatpush2.msra.mxu0 %v1439
          %1835 = vmatprep.subr.mxu0 0.0
          %1836 = vmatpush2.msra.mxu0 %v1438
          %1837 = vmatprep.mubr.f32.mxu0 %v1704
          %1838 = vmatmul.mubr.f32.gmra.mxu0 %v1696
          %v1839 = vpop.f32.mrf.mxu0
          %v1840 = vadd.f32 %v1683, %v1839
          %v1841 = vpop.f32.mrf.mxu0
          %1842 = vdwg.mxu0
          %1843 = vmatprep.subr.mxu0 0.0
          %1844 = vmatpush1.msra.mxu0 %v1469
          %1845 = vmatprep.subr.mxu0 0.0
          %1846 = vmatpush1.msra.mxu0 %v1468
          %1847 = vmatprep.subr.mxu0 0.0
          %1848 = vmatpush1.msra.mxu0 %v1467
          %1849 = vmatprep.subr.mxu0 0.0
          %1850 = vmatpush1.msra.mxu0 %v1466
          %1851 = vmatprep.subr.mxu0 0.0
          %1852 = vmatpush1.msra.mxu0 %v1465
          %1853 = vmatprep.subr.mxu0 0.0
          %1854 = vmatpush1.msra.mxu0 %v1464
          %1855 = vmatprep.subr.mxu0 0.0
          %1856 = vmatpush1.msra.mxu0 %v1463
          %1857 = vmatprep.subr.mxu0 0.0
          %1858 = vmatpush1.msra.mxu0 %v1462
          %1859 = vmatprep.subr.mxu0 0.0
          %1860 = vmatpush1.msra.mxu0 %v1461
          %1861 = vmatprep.subr.mxu0 0.0
          %1862 = vmatpush1.msra.mxu0 %v1460
          %1863 = vmatprep.subr.mxu0 0.0
          %1864 = vmatpush1.msra.mxu0 %v1459
          %1865 = vmatprep.subr.mxu0 0.0
          %1866 = vmatpush1.msra.mxu0 %v1458
          %1867 = vmatprep.subr.mxu0 0.0
          %1868 = vmatpush1.msra.mxu0 %v1457
          %1869 = vmatprep.subr.mxu0 0.0
          %1870 = vmatpush1.msra.mxu0 %v1456
          %1871 = vmatprep.subr.mxu0 0.0
          %1872 = vmatpush1.msra.mxu0 %v1455
          %1873 = vmatprep.subr.mxu0 0.0
          %1874 = vmatpush1.msra.mxu0 %v1454
          %1875 = vmatprep.subr.mxu0 0.0
          %1876 = vmatpush2.msra.mxu0 %v1485
          %1877 = vmatprep.subr.mxu0 0.0
          %1878 = vmatpush2.msra.mxu0 %v1484
          %1879 = vmatprep.subr.mxu0 0.0
          %1880 = vmatpush2.msra.mxu0 %v1483
          %1881 = vmatprep.subr.mxu0 0.0
          %1882 = vmatpush2.msra.mxu0 %v1482
          %1883 = vmatprep.subr.mxu0 0.0
          %1884 = vmatpush2.msra.mxu0 %v1481
          %1885 = vmatprep.subr.mxu0 0.0
          %1886 = vmatpush2.msra.mxu0 %v1480
          %1887 = vmatprep.subr.mxu0 0.0
          %1888 = vmatpush2.msra.mxu0 %v1479
          %1889 = vmatprep.subr.mxu0 0.0
          %1890 = vmatpush2.msra.mxu0 %v1478
          %1891 = vmatprep.subr.mxu0 0.0
          %1892 = vmatpush2.msra.mxu0 %v1477
          %1893 = vmatprep.subr.mxu0 0.0
          %1894 = vmatpush2.msra.mxu0 %v1476
          %1895 = vmatprep.subr.mxu0 0.0
          %1896 = vmatpush2.msra.mxu0 %v1475
          %1897 = vmatprep.subr.mxu0 0.0
          %1898 = vmatpush2.msra.mxu0 %v1474
          %1899 = vmatprep.subr.mxu0 0.0
          %1900 = vmatpush2.msra.mxu0 %v1473
          %1901 = vmatprep.subr.mxu0 0.0
          %1902 = vmatpush2.msra.mxu0 %v1472
          %1903 = vmatprep.subr.mxu0 0.0
          %1904 = vmatpush2.msra.mxu0 %v1471
          %1905 = vmatprep.subr.mxu0 0.0
          %1906 = vmatpush2.msra.mxu0 %v1470
          %1907 = vmatprep.mubr.f32.mxu0 %v1705
          %1908 = vmatmul.mubr.f32.gmra.mxu0 %v1703
          %v1909 = vpop.f32.mrf.mxu0
          %v1910 = vadd.f32 %v1840, %v1909
          %v1911 = vpop.f32.mrf.mxu0
          %1912 = vdwg.mxu0
          %1913 = vmatprep.subr.mxu0 0.0
          %1914 = vmatpush1.msra.mxu0 %v1501
          %1915 = vmatprep.subr.mxu0 0.0
          %1916 = vmatpush1.msra.mxu0 %v1500
          %1917 = vmatprep.subr.mxu0 0.0
          %1918 = vmatpush1.msra.mxu0 %v1499
          %1919 = vmatprep.subr.mxu0 0.0
          %1920 = vmatpush1.msra.mxu0 %v1498
          %1921 = vmatprep.subr.mxu0 0.0
          %1922 = vmatpush1.msra.mxu0 %v1497
          %1923 = vmatprep.subr.mxu0 0.0
          %1924 = vmatpush1.msra.mxu0 %v1496
          %1925 = vmatprep.subr.mxu0 0.0
          %1926 = vmatpush1.msra.mxu0 %v1495
          %1927 = vmatprep.subr.mxu0 0.0
          %1928 = vmatpush1.msra.mxu0 %v1494
          %1929 = vmatprep.subr.mxu0 0.0
          %1930 = vmatpush1.msra.mxu0 %v1493
          %1931 = vmatprep.subr.mxu0 0.0
          %1932 = vmatpush1.msra.mxu0 %v1492
          %1933 = vmatprep.subr.mxu0 0.0
          %1934 = vmatpush1.msra.mxu0 %v1491
          %1935 = vmatprep.subr.mxu0 0.0
          %1936 = vmatpush1.msra.mxu0 %v1490
          %1937 = vmatprep.subr.mxu0 0.0
          %1938 = vmatpush1.msra.mxu0 %v1489
          %1939 = vmatprep.subr.mxu0 0.0
          %1940 = vmatpush1.msra.mxu0 %v1488
          %1941 = vmatprep.subr.mxu0 0.0
          %1942 = vmatpush1.msra.mxu0 %v1487
          %1943 = vmatprep.subr.mxu0 0.0
          %1944 = vmatpush1.msra.mxu0 %v1486
          %1945 = vmatprep.subr.mxu0 0.0
          %1946 = vmatpush2.msra.mxu0 %v1517
          %1947 = vmatprep.subr.mxu0 0.0
          %1948 = vmatpush2.msra.mxu0 %v1516
          %1949 = vmatprep.subr.mxu0 0.0
          %1950 = vmatpush2.msra.mxu0 %v1515
          %1951 = vmatprep.subr.mxu0 0.0
          %1952 = vmatpush2.msra.mxu0 %v1514
          %1953 = vmatprep.subr.mxu0 0.0
          %1954 = vmatpush2.msra.mxu0 %v1513
          %1955 = vmatprep.subr.mxu0 0.0
          %1956 = vmatpush2.msra.mxu0 %v1512
          %1957 = vmatprep.subr.mxu0 0.0
          %1958 = vmatpush2.msra.mxu0 %v1511
          %1959 = vmatprep.subr.mxu0 0.0
          %1960 = vmatpush2.msra.mxu0 %v1510
          %1961 = vmatprep.subr.mxu0 0.0
          %1962 = vmatpush2.msra.mxu0 %v1509
          %1963 = vmatprep.subr.mxu0 0.0
          %1964 = vmatpush2.msra.mxu0 %v1508
          %1965 = vmatprep.subr.mxu0 0.0
          %1966 = vmatpush2.msra.mxu0 %v1507
          %1967 = vmatprep.subr.mxu0 0.0
          %1968 = vmatpush2.msra.mxu0 %v1506
          %1969 = vmatprep.subr.mxu0 0.0
          %1970 = vmatpush2.msra.mxu0 %v1505
          %1971 = vmatprep.subr.mxu0 0.0
          %1972 = vmatpush2.msra.mxu0 %v1504
          %1973 = vmatprep.subr.mxu0 0.0
          %1974 = vmatpush2.msra.mxu0 %v1503
          %1975 = vmatprep.subr.mxu0 0.0
          %1976 = vmatpush2.msra.mxu0 %v1502
          %1977 = vmatprep.mubr.f32.mxu0 %v1721
          %1978 = vmatmul.mubr.f32.gmra.mxu0 %v1713
          %v1979 = vpop.f32.mrf.mxu0
          %v1980 = vadd.f32 %v1910, %v1979
          %v1981 = vpop.f32.mrf.mxu0
          %1982 = vdwg.mxu0
          %1983 = vmatprep.subr.mxu0 0.0
          %1984 = vmatpush1.msra.mxu0 %v1533
          %1985 = vmatprep.subr.mxu0 0.0
          %1986 = vmatpush1.msra.mxu0 %v1532
          %1987 = vmatprep.subr.mxu0 0.0
          %1988 = vmatpush1.msra.mxu0 %v1531
          %1989 = vmatprep.subr.mxu0 0.0
          %1990 = vmatpush1.msra.mxu0 %v1530
          %1991 = vmatprep.subr.mxu0 0.0
          %1992 = vmatpush1.msra.mxu0 %v1529
          %1993 = vmatprep.subr.mxu0 0.0
          %1994 = vmatpush1.msra.mxu0 %v1528
          %1995 = vmatprep.subr.mxu0 0.0
          %1996 = vmatpush1.msra.mxu0 %v1527
          %1997 = vmatprep.subr.mxu0 0.0
          %1998 = vmatpush1.msra.mxu0 %v1526
          %1999 = vmatprep.subr.mxu0 0.0
          %2000 = vmatpush1.msra.mxu0 %v1525
          %2001 = vmatprep.subr.mxu0 0.0
          %2002 = vmatpush1.msra.mxu0 %v1524
          %2003 = vmatprep.subr.mxu0 0.0
          %2004 = vmatpush1.msra.mxu0 %v1523
          %2005 = vmatprep.subr.mxu0 0.0
          %2006 = vmatpush1.msra.mxu0 %v1522
          %2007 = vmatprep.subr.mxu0 0.0
          %2008 = vmatpush1.msra.mxu0 %v1521
          %2009 = vmatprep.subr.mxu0 0.0
          %2010 = vmatpush1.msra.mxu0 %v1520
          %2011 = vmatprep.subr.mxu0 0.0
          %2012 = vmatpush1.msra.mxu0 %v1519
          %2013 = vmatprep.subr.mxu0 0.0
          %2014 = vmatpush1.msra.mxu0 %v1518
          %2015 = vmatprep.subr.mxu0 0.0
          %2016 = vmatpush2.msra.mxu0 %v1549
          %2017 = vmatprep.subr.mxu0 0.0
          %2018 = vmatpush2.msra.mxu0 %v1548
          %2019 = vmatprep.subr.mxu0 0.0
          %2020 = vmatpush2.msra.mxu0 %v1547
          %2021 = vmatprep.subr.mxu0 0.0
          %2022 = vmatpush2.msra.mxu0 %v1546
          %2023 = vmatprep.subr.mxu0 0.0
          %2024 = vmatpush2.msra.mxu0 %v1545
          %2025 = vmatprep.subr.mxu0 0.0
          %2026 = vmatpush2.msra.mxu0 %v1544
          %2027 = vmatprep.subr.mxu0 0.0
          %2028 = vmatpush2.msra.mxu0 %v1543
          %2029 = vmatprep.subr.mxu0 0.0
          %2030 = vmatpush2.msra.mxu0 %v1542
          %2031 = vmatprep.subr.mxu0 0.0
          %2032 = vmatpush2.msra.mxu0 %v1541
          %2033 = vmatprep.subr.mxu0 0.0
          %2034 = vmatpush2.msra.mxu0 %v1540
          %2035 = vmatprep.subr.mxu0 0.0
          %2036 = vmatpush2.msra.mxu0 %v1539
          %2037 = vmatprep.subr.mxu0 0.0
          %2038 = vmatpush2.msra.mxu0 %v1538
          %2039 = vmatprep.subr.mxu0 0.0
          %2040 = vmatpush2.msra.mxu0 %v1537
          %2041 = vmatprep.subr.mxu0 0.0
          %2042 = vmatpush2.msra.mxu0 %v1536
          %2043 = vmatprep.subr.mxu0 0.0
          %2044 = vmatpush2.msra.mxu0 %v1535
          %2045 = vmatprep.subr.mxu0 0.0
          %2046 = vmatpush2.msra.mxu0 %v1534
          %2047 = vmatprep.mubr.f32.mxu0 %v1722
          %2048 = vmatmul.mubr.f32.gmra.mxu0 %v1720
          %v2049 = vpop.f32.mrf.mxu0
          %v2050 = vadd.f32 %v1980, %v2049
          %v2051 = vpop.f32.mrf.mxu0
          %2052 = vdwg.mxu0
          %2053 = vmatprep.subr.mxu0 0.0
          %2054 = vmatpush1.msra.mxu0 %v1565
          %2055 = vmatprep.subr.mxu0 0.0
          %2056 = vmatpush1.msra.mxu0 %v1564
          %2057 = vmatprep.subr.mxu0 0.0
          %2058 = vmatpush1.msra.mxu0 %v1563
          %2059 = vmatprep.subr.mxu0 0.0
          %2060 = vmatpush1.msra.mxu0 %v1562
          %2061 = vmatprep.subr.mxu0 0.0
          %2062 = vmatpush1.msra.mxu0 %v1561
          %2063 = vmatprep.subr.mxu0 0.0
          %2064 = vmatpush1.msra.mxu0 %v1560
          %2065 = vmatprep.subr.mxu0 0.0
          %2066 = vmatpush1.msra.mxu0 %v1559
          %2067 = vmatprep.subr.mxu0 0.0
          %2068 = vmatpush1.msra.mxu0 %v1558
          %2069 = vmatprep.subr.mxu0 0.0
          %2070 = vmatpush1.msra.mxu0 %v1557
          %2071 = vmatprep.subr.mxu0 0.0
          %2072 = vmatpush1.msra.mxu0 %v1556
          %2073 = vmatprep.subr.mxu0 0.0
          %2074 = vmatpush1.msra.mxu0 %v1555
          %2075 = vmatprep.subr.mxu0 0.0
          %2076 = vmatpush1.msra.mxu0 %v1554
          %2077 = vmatprep.subr.mxu0 0.0
          %2078 = vmatpush1.msra.mxu0 %v1553
          %2079 = vmatprep.subr.mxu0 0.0
          %2080 = vmatpush1.msra.mxu0 %v1552
          %2081 = vmatprep.subr.mxu0 0.0
          %2082 = vmatpush1.msra.mxu0 %v1551
          %2083 = vmatprep.subr.mxu0 0.0
          %2084 = vmatpush1.msra.mxu0 %v1550
          %2085 = vmatprep.subr.mxu0 0.0
          %2086 = vmatpush2.msra.mxu0 %v1581
          %2087 = vmatprep.subr.mxu0 0.0
          %2088 = vmatpush2.msra.mxu0 %v1580
          %2089 = vmatprep.subr.mxu0 0.0
          %2090 = vmatpush2.msra.mxu0 %v1579
          %2091 = vmatprep.subr.mxu0 0.0
          %2092 = vmatpush2.msra.mxu0 %v1578
          %2093 = vmatprep.subr.mxu0 0.0
          %2094 = vmatpush2.msra.mxu0 %v1577
          %2095 = vmatprep.subr.mxu0 0.0
          %2096 = vmatpush2.msra.mxu0 %v1576
          %2097 = vmatprep.subr.mxu0 0.0
          %2098 = vmatpush2.msra.mxu0 %v1575
          %2099 = vmatprep.subr.mxu0 0.0
          %2100 = vmatpush2.msra.mxu0 %v1574
          %2101 = vmatprep.subr.mxu0 0.0
          %2102 = vmatpush2.msra.mxu0 %v1573
          %2103 = vmatprep.subr.mxu0 0.0
          %2104 = vmatpush2.msra.mxu0 %v1572
          %2105 = vmatprep.subr.mxu0 0.0
          %2106 = vmatpush2.msra.mxu0 %v1571
          %2107 = vmatprep.subr.mxu0 0.0
          %2108 = vmatpush2.msra.mxu0 %v1570
          %2109 = vmatprep.subr.mxu0 0.0
          %2110 = vmatpush2.msra.mxu0 %v1569
          %2111 = vmatprep.subr.mxu0 0.0
          %2112 = vmatpush2.msra.mxu0 %v1568
          %2113 = vmatprep.subr.mxu0 0.0
          %2114 = vmatpush2.msra.mxu0 %v1567
          %2115 = vmatprep.subr.mxu0 0.0
          %2116 = vmatpush2.msra.mxu0 %v1566
          %2117 = vmatprep.mubr.f32.mxu0 %v1738
          %2118 = vmatmul.mubr.f32.gmra.mxu0 %v1730
          %v2119 = vpop.f32.mrf.mxu0
          %v2120 = vadd.f32 %v2050, %v2119
          %v2121 = vpop.f32.mrf.mxu0
          %2122 = vdwg.mxu0
          %2123 = vmatprep.subr.mxu0 0.0
          %2124 = vmatpush1.msra.mxu0 %v1597
          %2125 = vmatprep.subr.mxu0 0.0
          %2126 = vmatpush1.msra.mxu0 %v1596
          %2127 = vmatprep.subr.mxu0 0.0
          %2128 = vmatpush1.msra.mxu0 %v1595
          %2129 = vmatprep.subr.mxu0 0.0
          %2130 = vmatpush1.msra.mxu0 %v1594
          %2131 = vmatprep.subr.mxu0 0.0
          %2132 = vmatpush1.msra.mxu0 %v1593
          %2133 = vmatprep.subr.mxu0 0.0
          %2134 = vmatpush1.msra.mxu0 %v1592
          %2135 = vmatprep.subr.mxu0 0.0
          %2136 = vmatpush1.msra.mxu0 %v1591
          %2137 = vmatprep.subr.mxu0 0.0
          %2138 = vmatpush1.msra.mxu0 %v1590
          %2139 = vmatprep.subr.mxu0 0.0
          %2140 = vmatpush1.msra.mxu0 %v1589
          %2141 = vmatprep.subr.mxu0 0.0
          %2142 = vmatpush1.msra.mxu0 %v1588
          %2143 = vmatprep.subr.mxu0 0.0
          %2144 = vmatpush1.msra.mxu0 %v1587
          %2145 = vmatprep.subr.mxu0 0.0
          %2146 = vmatpush1.msra.mxu0 %v1586
          %2147 = vmatprep.subr.mxu0 0.0
          %2148 = vmatpush1.msra.mxu0 %v1585
          %2149 = vmatprep.subr.mxu0 0.0
          %2150 = vmatpush1.msra.mxu0 %v1584
          %2151 = vmatprep.subr.mxu0 0.0
          %2152 = vmatpush1.msra.mxu0 %v1583
          %2153 = vmatprep.subr.mxu0 0.0
          %2154 = vmatpush1.msra.mxu0 %v1582
          %2155 = vmatprep.subr.mxu0 0.0
          %2156 = vmatpush2.msra.mxu0 %v1613
          %2157 = vmatprep.subr.mxu0 0.0
          %2158 = vmatpush2.msra.mxu0 %v1612
          %2159 = vmatprep.subr.mxu0 0.0
          %2160 = vmatpush2.msra.mxu0 %v1611
          %2161 = vmatprep.subr.mxu0 0.0
          %2162 = vmatpush2.msra.mxu0 %v1610
          %2163 = vmatprep.subr.mxu0 0.0
          %2164 = vmatpush2.msra.mxu0 %v1609
          %2165 = vmatprep.subr.mxu0 0.0
          %2166 = vmatpush2.msra.mxu0 %v1608
          %2167 = vmatprep.subr.mxu0 0.0
          %2168 = vmatpush2.msra.mxu0 %v1607
          %2169 = vmatprep.subr.mxu0 0.0
          %2170 = vmatpush2.msra.mxu0 %v1606
          %2171 = vmatprep.subr.mxu0 0.0
          %2172 = vmatpush2.msra.mxu0 %v1605
          %2173 = vmatprep.subr.mxu0 0.0
          %2174 = vmatpush2.msra.mxu0 %v1604
          %2175 = vmatprep.subr.mxu0 0.0
          %2176 = vmatpush2.msra.mxu0 %v1603
          %2177 = vmatprep.subr.mxu0 0.0
          %2178 = vmatpush2.msra.mxu0 %v1602
          %2179 = vmatprep.subr.mxu0 0.0
          %2180 = vmatpush2.msra.mxu0 %v1601
          %2181 = vmatprep.subr.mxu0 0.0
          %2182 = vmatpush2.msra.mxu0 %v1600
          %2183 = vmatprep.subr.mxu0 0.0
          %2184 = vmatpush2.msra.mxu0 %v1599
          %2185 = vmatprep.subr.mxu0 0.0
          %2186 = vmatpush2.msra.mxu0 %v1598
          %2187 = vmatprep.mubr.f32.mxu0 %v1739
          %2188 = vmatmul.mubr.f32.gmra.mxu0 %v1737
          %v2189 = vpop.f32.mrf.mxu0
          %v2190 = vadd.f32 %v2120, %v2189
          %v2191 = vpop.f32.mrf.mxu0
          %2192 = vdwg.mxu0
          %2193 = vmatprep.subr.mxu0 0.0
          %2194 = vmatpush1.msra.mxu0 %v1629
          %2195 = vmatprep.subr.mxu0 0.0
          %2196 = vmatpush1.msra.mxu0 %v1628
          %2197 = vmatprep.subr.mxu0 0.0
          %2198 = vmatpush1.msra.mxu0 %v1627
          %2199 = vmatprep.subr.mxu0 0.0
          %2200 = vmatpush1.msra.mxu0 %v1626
          %2201 = vmatprep.subr.mxu0 0.0
          %2202 = vmatpush1.msra.mxu0 %v1625
          %2203 = vmatprep.subr.mxu0 0.0
          %2204 = vmatpush1.msra.mxu0 %v1624
          %2205 = vmatprep.subr.mxu0 0.0
          %2206 = vmatpush1.msra.mxu0 %v1623
          %2207 = vmatprep.subr.mxu0 0.0
          %2208 = vmatpush1.msra.mxu0 %v1622
          %2209 = vmatprep.subr.mxu0 0.0
          %2210 = vmatpush1.msra.mxu0 %v1621
          %2211 = vmatprep.subr.mxu0 0.0
          %2212 = vmatpush1.msra.mxu0 %v1620
          %2213 = vmatprep.subr.mxu0 0.0
          %2214 = vmatpush1.msra.mxu0 %v1619
          %2215 = vmatprep.subr.mxu0 0.0
          %2216 = vmatpush1.msra.mxu0 %v1618
          %2217 = vmatprep.subr.mxu0 0.0
          %2218 = vmatpush1.msra.mxu0 %v1617
          %2219 = vmatprep.subr.mxu0 0.0
          %2220 = vmatpush1.msra.mxu0 %v1616
          %2221 = vmatprep.subr.mxu0 0.0
          %2222 = vmatpush1.msra.mxu0 %v1615
          %2223 = vmatprep.subr.mxu0 0.0
          %2224 = vmatpush1.msra.mxu0 %v1614
          %2225 = vmatprep.subr.mxu0 0.0
          %2226 = vmatpush2.msra.mxu0 %v1645
          %2227 = vmatprep.subr.mxu0 0.0
          %2228 = vmatpush2.msra.mxu0 %v1644
          %2229 = vmatprep.subr.mxu0 0.0
          %2230 = vmatpush2.msra.mxu0 %v1643
          %2231 = vmatprep.subr.mxu0 0.0
          %2232 = vmatpush2.msra.mxu0 %v1642
          %2233 = vmatprep.subr.mxu0 0.0
          %2234 = vmatpush2.msra.mxu0 %v1641
          %2235 = vmatprep.subr.mxu0 0.0
          %2236 = vmatpush2.msra.mxu0 %v1640
          %2237 = vmatprep.subr.mxu0 0.0
          %2238 = vmatpush2.msra.mxu0 %v1639
          %2239 = vmatprep.subr.mxu0 0.0
          %2240 = vmatpush2.msra.mxu0 %v1638
          %2241 = vmatprep.subr.mxu0 0.0
          %2242 = vmatpush2.msra.mxu0 %v1637
          %2243 = vmatprep.subr.mxu0 0.0
          %2244 = vmatpush2.msra.mxu0 %v1636
          %2245 = vmatprep.subr.mxu0 0.0
          %2246 = vmatpush2.msra.mxu0 %v1635
          %2247 = vmatprep.subr.mxu0 0.0
          %2248 = vmatpush2.msra.mxu0 %v1634
          %2249 = vmatprep.subr.mxu0 0.0
          %2250 = vmatpush2.msra.mxu0 %v1633
          %2251 = vmatprep.subr.mxu0 0.0
          %2252 = vmatpush2.msra.mxu0 %v1632
          %2253 = vmatprep.subr.mxu0 0.0
          %2254 = vmatpush2.msra.mxu0 %v1631
          %2255 = vmatprep.subr.mxu0 0.0
          %2256 = vmatpush2.msra.mxu0 %v1630
          %2257 = vmatprep.mubr.f32.mxu0 %v1755
          %2258 = vmatmul.mubr.f32.gmra.mxu0 %v1747
          %v2259 = vpop.f32.mrf.mxu0
          %v2260 = vadd.f32 %v2190, %v2259
          %v2261 = vpop.f32.mrf.mxu0
          %2262 = vdwg.mxu0
          %2263 = vmatprep.subr.mxu0 0.0
          %2264 = vmatpush1.msra.mxu0 %v1661
          %2265 = vmatprep.subr.mxu0 0.0
          %2266 = vmatpush1.msra.mxu0 %v1660
          %2267 = vmatprep.subr.mxu0 0.0
          %2268 = vmatpush1.msra.mxu0 %v1659
          %2269 = vmatprep.subr.mxu0 0.0
          %2270 = vmatpush1.msra.mxu0 %v1658
          %2271 = vmatprep.subr.mxu0 0.0
          %2272 = vmatpush1.msra.mxu0 %v1657
          %2273 = vmatprep.subr.mxu0 0.0
          %2274 = vmatpush1.msra.mxu0 %v1656
          %2275 = vmatprep.subr.mxu0 0.0
          %2276 = vmatpush1.msra.mxu0 %v1655
          %2277 = vmatprep.subr.mxu0 0.0
          %2278 = vmatpush1.msra.mxu0 %v1654
          %2279 = vmatprep.subr.mxu0 0.0
          %2280 = vmatpush1.msra.mxu0 %v1653
          %2281 = vmatprep.subr.mxu0 0.0
          %2282 = vmatpush1.msra.mxu0 %v1652
          %2283 = vmatprep.subr.mxu0 0.0
          %2284 = vmatpush1.msra.mxu0 %v1651
          %2285 = vmatprep.subr.mxu0 0.0
          %2286 = vmatpush1.msra.mxu0 %v1650
          %2287 = vmatprep.subr.mxu0 0.0
          %2288 = vmatpush1.msra.mxu0 %v1649
          %2289 = vmatprep.subr.mxu0 0.0
          %2290 = vmatpush1.msra.mxu0 %v1648
          %2291 = vmatprep.subr.mxu0 0.0
          %2292 = vmatpush1.msra.mxu0 %v1647
          %2293 = vmatprep.subr.mxu0 0.0
          %2294 = vmatpush1.msra.mxu0 %v1646
          %2295 = vmatprep.subr.mxu0 0.0
          %2296 = vmatpush2.msra.mxu0 %v1677
          %2297 = vmatprep.subr.mxu0 0.0
          %2298 = vmatpush2.msra.mxu0 %v1676
          %2299 = vmatprep.subr.mxu0 0.0
          %2300 = vmatpush2.msra.mxu0 %v1675
          %2301 = vmatprep.subr.mxu0 0.0
          %2302 = vmatpush2.msra.mxu0 %v1674
          %2303 = vmatprep.subr.mxu0 0.0
          %2304 = vmatpush2.msra.mxu0 %v1673
          %2305 = vmatprep.subr.mxu0 0.0
          %2306 = vmatpush2.msra.mxu0 %v1672
          %2307 = vmatprep.subr.mxu0 0.0
          %2308 = vmatpush2.msra.mxu0 %v1671
          %2309 = vmatprep.subr.mxu0 0.0
          %2310 = vmatpush2.msra.mxu0 %v1670
          %2311 = vmatprep.subr.mxu0 0.0
          %2312 = vmatpush2.msra.mxu0 %v1669
          %2313 = vmatprep.subr.mxu0 0.0
          %2314 = vmatpush2.msra.mxu0 %v1668
          %2315 = vmatprep.subr.mxu0 0.0
          %2316 = vmatpush2.msra.mxu0 %v1667
          %2317 = vmatprep.subr.mxu0 0.0
          %2318 = vmatpush2.msra.mxu0 %v1666
          %2319 = vmatprep.subr.mxu0 0.0
          %2320 = vmatpush2.msra.mxu0 %v1665
          %2321 = vmatprep.subr.mxu0 0.0
          %2322 = vmatpush2.msra.mxu0 %v1664
          %2323 = vmatprep.subr.mxu0 0.0
          %2324 = vmatpush2.msra.mxu0 %v1663
          %2325 = vmatprep.subr.mxu0 0.0
          %2326 = vmatpush2.msra.mxu0 %v1662
          %2327 = vmatprep.mubr.f32.mxu0 %v1756
          %2328 = vmatmul.mubr.f32.gmra.mxu0 %v1754
          %v2329 = vpop.f32.mrf.mxu0
          %v2330 = vadd.f32 %v2260, %v2329
          %v2331 = vpop.f32.mrf.mxu0
          %2332 = vdwg.mxu0
          %v2333 = vmax.f32 %v2330, 0.0
          %v2334 = vld [vmem:[%s9] sm:$0xff]
          %v2335 = vld [vmem:[%s9 + $0x8] sm:$0xff]
          %v2336 = vld [vmem:[%s9 + $0x10] sm:$0xff]
          %v2337 = vld [vmem:[%s9 + $0x18] sm:$0xff]
          %v2338 = vld [vmem:[%s9 + $0x20] sm:$0xff]
          %v2339 = vld [vmem:[%s9 + $0x28] sm:$0xff]
          %v2340 = vld [vmem:[%s9 + $0x30] sm:$0xff]
          %v2341 = vld [vmem:[%s9 + $0x38] sm:$0xff]
          %v2342 = vld [vmem:[%s9 + $0x40] sm:$0xff]
          %v2343 = vld [vmem:[%s9 + $0x48] sm:$0xff]
          %v2344 = vld [vmem:[%s9 + $0x50] sm:$0xff]
          %v2345 = vld [vmem:[%s9 + $0x58] sm:$0xff]
          %v2346 = vld [vmem:[%s9 + $0x60] sm:$0xff]
          %v2347 = vld [vmem:[%s9 + $0x68] sm:$0xff]
          %v2348 = vld [vmem:[%s9 + $0x70] sm:$0xff]
          %v2349 = vld [vmem:[%s9 + $0x78] sm:$0xff]
          %v2350 = vld [vmem:[%s10] sm:$0x1]
          %v2352 = vlaneseq
          %v2353 = vshrl.u32 %v2352, 7
          %v2354 = vsub.s32 0, %v2353
          %v2355 = vrot.slane %v2350, %v2354
          %2357 = vmatprep.subr.mxu0 0.0
          %2358 = vmatpush1.msra.mxu0 %v2349
          %2359 = vmatprep.subr.mxu0 0.0
          %2360 = vmatpush1.msra.mxu0 %v2348
          %2361 = vmatprep.subr.mxu0 0.0
          %2362 = vmatpush1.msra.mxu0 %v2347
          %2363 = vmatprep.subr.mxu0 0.0
          %2364 = vmatpush1.msra.mxu0 %v2346
          %2365 = vmatprep.subr.mxu0 0.0
          %2366 = vmatpush1.msra.mxu0 %v2345
          %2367 = vmatprep.subr.mxu0 0.0
          %2368 = vmatpush1.msra.mxu0 %v2344
          %2369 = vmatprep.subr.mxu0 0.0
          %2370 = vmatpush1.msra.mxu0 %v2343
          %2371 = vmatprep.subr.mxu0 0.0
          %2372 = vmatpush1.msra.mxu0 %v2342
          %2373 = vmatprep.subr.mxu0 0.0
          %2374 = vmatpush1.msra.mxu0 %v2341
          %2375 = vmatprep.subr.mxu0 0.0
          %2376 = vmatpush1.msra.mxu0 %v2340
          %2377 = vmatprep.subr.mxu0 0.0
          %2378 = vmatpush1.msra.mxu0 %v2339
          %2379 = vmatprep.subr.mxu0 0.0
          %2380 = vmatpush1.msra.mxu0 %v2338
          %2381 = vmatprep.subr.mxu0 0.0
          %2382 = vmatpush1.msra.mxu0 %v2337
          %2383 = vmatprep.subr.mxu0 0.0
          %2384 = vmatpush1.msra.mxu0 %v2336
          %2385 = vmatprep.subr.mxu0 0.0
          %2386 = vmatpush1.msra.mxu0 %v2335
          %2387 = vmatprep.subr.mxu0 0.0
          %2388 = vmatpush1.msra.mxu0 %v2334
          %2389 = vmatprep.subr.mxu0 0.0
          %2390 = vmatpush2.msra.mxu0 0.0
          %2391 = vmatprep.subr.mxu0 0.0
          %2392 = vmatpush2.msra.mxu0 0.0
          %2393 = vmatprep.subr.mxu0 0.0
          %2394 = vmatpush2.msra.mxu0 0.0
          %2395 = vmatprep.subr.mxu0 0.0
          %2396 = vmatpush2.msra.mxu0 0.0
          %2397 = vmatprep.subr.mxu0 0.0
          %2398 = vmatpush2.msra.mxu0 0.0
          %2399 = vmatprep.subr.mxu0 0.0
          %2400 = vmatpush2.msra.mxu0 0.0
          %2401 = vmatprep.subr.mxu0 0.0
          %2402 = vmatpush2.msra.mxu0 0.0
          %2403 = vmatprep.subr.mxu0 0.0
          %2404 = vmatpush2.msra.mxu0 0.0
          %2405 = vmatprep.subr.mxu0 0.0
          %2406 = vmatpush2.msra.mxu0 0.0
          %2407 = vmatprep.subr.mxu0 0.0
          %2408 = vmatpush2.msra.mxu0 0.0
          %2409 = vmatprep.subr.mxu0 0.0
          %2410 = vmatpush2.msra.mxu0 0.0
          %2411 = vmatprep.subr.mxu0 0.0
          %2412 = vmatpush2.msra.mxu0 0.0
          %2413 = vmatprep.subr.mxu0 0.0
          %2414 = vmatpush2.msra.mxu0 0.0
          %2415 = vmatprep.subr.mxu0 0.0
          %2416 = vmatpush2.msra.mxu0 0.0
          %2417 = vmatprep.subr.mxu0 0.0
          %2418 = vmatpush2.msra.mxu0 0.0
          %2419 = vmatprep.subr.mxu0 0.0
          %2420 = vmatpush2.msra.mxu0 0.0
          %2421 = vmatprep.mubr.f32.mxu0 0.0
          %2422 = vmatmul.mubr.f32.gmra.mxu0 %v2333
          %v2423 = vpop.f32.mrf.mxu0
          %v2424 = vadd.f32 %v2355, %v2423
          %v2425 = vpop.f32.mrf.mxu0
          %2426 = vdwg.mxu0
          %vm2427 = vcmask 41984
          %2428 = vst.msk [vmem:[#allocation10] sm:$0x3] %vm2427, %v2424
        $region80: #{tpu_custom_call.1} parent=63 // pred_fallthru
          _
        // Predicated region
        $region81: #{tpu_custom_call.1} parent=63 // pred_check
          %p2429 = pneg %p269
        $region82: #{tpu_custom_call.1} parent=63 // pred_check_branch
          %2431 = sbr.rel (%p2429) target = $region84
        $region83: #{tpu_custom_call.1} parent=63 // pred_region
          %s2433 = ssub.s32 32, 32
          %2434 = vsyncadd [#allocation7], %s2433
          %s2436 = sshll.u32 [#allocation10], 4
          %s2437 = int_to_ptr.vmem [resolvable:$true] %s2436
          %2439 = dma.vmem_to_hbm [thread:$0]  %s2437, 32, %s11, [#allocation7]
        $region84: #{tpu_custom_call.1} parent=63 // pred_fallthru
          _
        // Predicated region
        $region85: #{tpu_custom_call.1} parent=63 // pred_check
          %p2440 = pneg %p269
        $region86: #{tpu_custom_call.1} parent=63 // pred_check_branch
          %2442 = sbr.rel (%p2440) target = $region88
        $region87: #{tpu_custom_call.1} parent=63 // pred_region
          %2443 = dma.done [#allocation7], 32
        $region88: #{tpu_custom_call.1} parent=63 // pred_fallthru
          _
      $region64: #{tpu_custom_call.1} parent=5 // pred_fallthru
        _
      %p2444 = scmp.le.s32.totalorder 2, %s20
      // Predicated region
      $region89: #{tpu_custom_call.1} parent=5 // pred_check
        %p2445 = pneg %p2444
      $region90: #{tpu_custom_call.1} parent=5 // pred_check_branch
        %2447 = sbr.rel (%p2445) target = $region92
      $region91: #{tpu_custom_call.1} parent=5 // pred_region
        %s2448 = ssub.s32 %s20, 2
      $region92: #{tpu_custom_call.1} parent=5 // pred_fallthru
        _
    $region6: #{tpu_custom_call.1} parent=1 // loop_footer
      %s24 = sadd.s32 1, %s20
    $region7: #{tpu_custom_call.1} parent=1 // loop_footer_branch
      %19 = sbr.rel target = $region3
    $region8: #{tpu_custom_call.1} parent=1 // loop_exit
      _
    %2449 = vsyncpa [#allocation6], 1
    %s2450 = scalar_lea.sflag [#allocation6], 1
    %2451 = vsyncpa %s2450, 1
    %2452 = vsyncpa [#allocation7], 1
    %s2453 = scalar_lea.sflag [#allocation7], 1
    %2454 = vsyncpa %s2453, 1
    %2455 = vsyncpa [#allocation8], 1
    %s2456 = scalar_lea.sflag [#allocation8], 1
    %2457 = vsyncpa %s2456, 1

</llo_original>
